<compile_context>
chip_gen: v7x
topology: tpu7x:2x2x1
jax: 0.10.0
libtpu: 0.0.40
codegen_flags: <defaults>
</compile_context>

<pallas_src>
import functools

import jax
import jax.numpy as jnp
from jax import lax
from jax.experimental import pallas as pl
from jax.experimental.pallas import tpu as pltpu

_WET_COST = 1e10
_LOG2E = 1.4426950408889634


def _hillstc_kernel(payload_ref, npix_ref, cover_ref, rand_ref,
                    b15h_ref, b15w_ref, stego_ref, *, H, W):
    x = cover_ref[0]                         # (Hp, Wp) f32, zero-padded cover
    Hp, Wp = x.shape
    f32 = jnp.float32

    # 1-D iotas only; broadcast on demand (no full int32 (Hp,Wp) temporaries).
    row_i = lax.broadcasted_iota(jnp.int32, (Hp, 1), 0)
    col_i = lax.broadcasted_iota(jnp.int32, (1, Wp), 1)

    def filt3(a, center, side, axis, real_n, pad_n):
        """Symmetric 3-tap filter (center, side, side) along `axis` with zero
        'same' padding over the real extent.  Uses XLU rolls; relies on the
        zero guard rows/cols when pad_n > real_n, otherwise explicitly masks
        the circular wrap at the two edges."""
        prev = pltpu.roll(a, 1, axis=axis)          # a[i-1]
        nxt = pltpu.roll(a, pad_n - 1, axis=axis)   # a[i+1]  (rotate by -1)
        if pad_n == real_n:                         # no guard zeros -> unwrap
            idx = row_i if axis == 0 else col_i
            prev = jnp.where(idx == 0, 0.0, prev)
            nxt = jnp.where(idx == pad_n - 1, 0.0, nxt)
        return center * a + side * (prev + nxt)

    # ----------------------------- HILL cost --------------------------------
    # Stage 1: KB high-pass = -([-1,2,-1] x [-1,2,-1]); sign vanishes under
    # abs().  Separable 3-tap passes on the XLU (no MXU work).
    t = filt3(x, 2.0, -1.0, 0, H, Hp)
    resid = jnp.abs(filt3(t, 2.0, -1.0, 1, W, Wp))

    pad_frame = (Hp != H) or (Wp != W)
    if pad_frame:
        in_frame = jnp.logical_and(row_i < H, col_i < W)
        # Clean zero padding for the next separable stage.
        resid = jnp.where(in_frame, resid, 0.0)

    # Stage 2: 3x3 box average, also via rolls (scale 1/9 folded in once).
    u = filt3(resid, 1.0, 1.0, 0, H, Hp)
    w1 = filt3(u, 1.0, 1.0, 1, W, Wp) * (1.0 / 9.0)

    # Approx reciprocal: single EUP vrcp (~2^-12 rel. err., smoothed by the
    # following 15x15 averaging).
    rho = jnp.minimum(pl.reciprocal(w1 + 1e-10, approx=True), _WET_COST)

    # Stage 3: 15x15 box average as banded MXU matmuls; the band matrices also
    # zero out any contribution from the padded frame.
    cost = jnp.dot(
        jnp.dot(b15h_ref[...], rho, preferred_element_type=jnp.float32),
        b15w_ref[...], preferred_element_type=jnp.float32)

    # Padded frame -> wet cost: contributes exactly 0 to the entropy, never
    # gets modified, and is cropped away in the wrapper.
    if pad_frame:
        cost = jnp.where(in_frame, cost, _WET_COST)

    rho_c = cost                              # rhoP1 == rhoM1 == costvalue

    # ----------------------- STC embedding simulator ------------------------
    payload = payload_ref[0]
    n = npix_ref[0].astype(f32)
    msg = payload * n
    alpha = msg / n

    def entropy_from_e(e, lam):
        # rhoP1 == rhoM1: algebraic per-pixel entropy
        #   H = log2(z) + lam*log2(e)*rho*(pP1+pM1),  z = 1 + 2*exp(-lam*rho)
        z = 1.0 + 2.0 * e
        p2 = (2.0 * e) * pl.reciprocal(z, approx=True)       # pP1 + pM1
        hpx = jnp.log2(z) + (lam * _LOG2E) * (rho_c * p2)
        # Two-stage reduce: lane-axis row sums, then a small final reduce.
        return jnp.sum(jnp.sum(hpx, axis=-1, keepdims=True))

    def ternary_entropy(lam):
        return entropy_from_e(jnp.exp(-lam * rho_c), lam)

    # Phase 1: bracket -- double l3 until entropy(l3) <= msg (max 11
    # doublings).  exp is evaluated once (at l3 = 1e3); every doubling squares
    # the cached e = exp(-l3*rho) on the VPU instead of re-running exp (EUP).
    e_init = jnp.exp(-f32(1e3) * rho_c)

    def bracket_cond(c):
        _, _, m3, it = c
        return jnp.logical_and(m3 > msg, it <= 10)

    def bracket_body(c):
        l3, e, _, it = c
        l3 = l3 * 2.0
        e = e * e                       # exp(-2*l*rho) = exp(-l*rho)^2
        return (l3, e, entropy_from_e(e, l3), it + 1)

    l3, _, m3, iters = lax.while_loop(
        bracket_cond, bracket_body,
        (f32(1e3), e_init, msg + 1.0, jnp.int32(0)))
    bracket_failed = iters > 10   # reference returns l3 directly in that case

    # Phase 2: bisection to hit the target message length (total iters < 30).
    def bisect_cond(c):
        _, _, m1, m3c, _, it = c
        keep = jnp.logical_and((m1 - m3c) / n > alpha / 1000.0, it < 30)
        return jnp.logical_and(keep, jnp.logical_not(bracket_failed))

    def bisect_body(c):
        l1, l3c, m1, m3c, _, it = c
        lam = l1 + (l3c - l1) * 0.5
        m2 = ternary_entropy(lam)
        go_hi = m2 < msg
        l3c = jnp.where(go_hi, lam, l3c)
        m3c = jnp.where(go_hi, m2, m3c)
        l1 = jnp.where(go_hi, l1, lam)
        m1 = jnp.where(go_hi, m1, m2)
        return (l1, l3c, m1, m3c, lam, it + 1)

    _, _, _, _, lam_b, _ = lax.while_loop(
        bisect_cond, bisect_body, (f32(0.0), l3, n, m3, f32(0.0), iters))
    lam = jnp.where(bracket_failed, l3, lam_b)

    # Change probabilities at the solved lambda; draw +1 / -1 / 0 changes.
    e = jnp.exp(-lam * rho_c)
    p1 = e * pl.reciprocal(1.0 + 2.0 * e, approx=True)        # pP1 == pM1
    r = rand_ref[0]
    noise = jnp.where(r < p1, 1.0, jnp.where(r >= 1.0 - p1, -1.0, 0.0))

    # forward returns stego_noise + cover
    stego_ref[0] = (noise + x).astype(stego_ref.dtype)


def _banded_box15(n_pad, n_real):
    """(n_pad, n_pad) banded matrix applying the 15-tap 1/15 box filter with
    zero 'same' padding over the first n_real rows/cols (rest masked to 0)."""
    i = jnp.arange(n_pad)
    d = jnp.abs(i[None, :] - i[:, None])
    band = jnp.where(d <= 7, jnp.float32(1.0 / 15.0), jnp.float32(0.0))
    valid = (i[:, None] < n_real) & (i[None, :] < n_real)
    return jnp.where(valid, band, 0.0).astype(jnp.float32)


def _round_up(x, m):
    return ((x + m - 1) // m) * m


def hill_stc(cover_nchw, payload, num_pixel, rand_change_nchw):
    """HILLSTC forward: returns stego image (noise + cover), NCHW float32."""
    N, C, H, W = cover_nchw.shape
    assert C == 1, "HILL operates on grayscale covers (C == 1)"
    # 128-aligned on both axes: lane-dense output and full MXU tiles for the
    # 15-tap banded matmuls (the band matrices mask the padding, so this is
    # free correctness-wise).
    Hp = _round_up(H, 128)
    Wp = _round_up(W, 128)

    cover = jnp.zeros((N, Hp, Wp), jnp.float32).at[:, :H, :W].set(
        cover_nchw.reshape(N, H, W).astype(jnp.float32))
    rand = jnp.zeros((N, Hp, Wp), jnp.float32).at[:, :H, :W].set(
        rand_change_nchw.reshape(N, H, W).astype(jnp.float32))

    # Only the 15x15 box filter needs band matrices now (2 constants, not 6).
    b15h = _banded_box15(Hp, H)
    b15w = _banded_box15(Wp, W)

    payload_arr = jnp.asarray([payload], jnp.float32)
    npix_arr = jnp.asarray([num_pixel], jnp.int32)

    kernel = functools.partial(_hillstc_kernel, H=H, W=W)

    smem = pl.BlockSpec(memory_space=pltpu.MemorySpace.SMEM)
    img_spec = pl.BlockSpec((1, Hp, Wp), lambda i: (i, 0, 0))

    # VMEM budget: double-buffered constants + image streams + ~8 live
    # full-image temporaries (x, resid, w1, rho, cost, e, hpx, r/noise).
    vmem_est = 4 * (2 * (Hp * Hp + Wp * Wp) + 3 * 2 * Hp * Wp + 8 * Hp * Wp)
    try:
        phys_vmem = int(pltpu.get_tpu_info().vmem_capacity_bytes)
    except Exception:
        phys_vmem = 64 << 20          # v7x floor if the query is unavailable
    cap = (phys_vmem * 7) // 8        # leave headroom for compiler scratch
    vmem_limit = int(min(max(2 * vmem_est, 32 << 20), cap))

    out = pl.pallas_call(
        kernel,
        out_shape=jax.ShapeDtypeStruct((N, Hp, Wp), jnp.float32),
        grid_spec=pltpu.PrefetchScalarGridSpec(
            num_scalar_prefetch=0,
            grid=(N,),
            in_specs=[
                smem,                                   # payload
                smem,                                   # num_pixel
                img_spec,                               # cover
                img_spec,                               # randChange
                pl.BlockSpec((Hp, Hp), lambda i: (0, 0)),   # 15x15 box (H side)
                pl.BlockSpec((Wp, Wp), lambda i: (0, 0)),   # 15x15 box (W side)
            ],
            out_specs=pl.BlockSpec((1, Hp, Wp), lambda i: (i, 0, 0)),
        ),
        compiler_params=pltpu.CompilerParams(
            dimension_semantics=("parallel",),
            vmem_limit_bytes=vmem_limit),
    )(payload_arr, npix_arr, cover, rand, b15h, b15w)

    return out[:, :H, :W].reshape(N, C, H, W)


if __name__ == "__main__":
    key = jax.random.PRNGKey(0)
    k_cover, k_rand = jax.random.split(key)

    N, C, H, W = 2, 1, 16, 16
    # 8-bit grayscale cover pixels, as floats (what the module consumes).
    cover = jax.random.randint(k_cover, (N, C, H, W), 0, 256).astype(jnp.float32)
    rand_change = jax.random.uniform(k_rand, (N, C, H, W), dtype=jnp.float32)
    payload = 0.4            # bits per pixel
    num_pixel = H * W

    stego = hill_stc(cover, payload, num_pixel, rand_change)
    stego = jax.block_until_ready(stego)

    assert stego.shape == (N, C, H, W)
    # Embedding only adds {-1, 0, +1} noise to the cover.
    max_change = float(jnp.max(jnp.abs(stego - cover)))
    assert max_change <= 1.0 + 1e-5

    print("KERNEL_OK")
</pallas_src>

<mosaic_0001>
module attributes {stable_mosaic.version = 11 : i64} {
  func.func @_hillstc_kernel(%arg0: i32, %arg1: memref<1xf32, #tpu.memory_space<smem>>, %arg2: memref<1xi32, #tpu.memory_space<smem>>, %arg3: memref<1x128x128xf32, #tpu.memory_space<vmem>>, %arg4: memref<1x128x128xf32, #tpu.memory_space<vmem>>, %arg5: memref<128x128xf32, #tpu.memory_space<vmem>>, %arg6: memref<128x128xf32, #tpu.memory_space<vmem>>, %arg7: memref<1x128x128xf32, #tpu.memory_space<vmem>>) attributes {dimension_semantics = [#tpu.dimension_semantics<parallel>], iteration_bounds = array<i64: 2>, scalar_prefetch = 0 : i64, scratch_operands = 0 : i64, tpu.core_type = #tpu.core_type<tc>, window_params = [{transform_indices = @transform_0, window_bounds = array<i64: 1>}, {transform_indices = @transform_1, window_bounds = array<i64: 1>}, {transform_indices = @transform_2, window_bounds = array<i64: 1, 128, 128>}, {transform_indices = @transform_3, window_bounds = array<i64: 1, 128, 128>}, {pipeline_mode = #tpu.pipeline_mode<synchronous>, transform_indices = @transform_4, window_bounds = array<i64: 128, 128>}, {pipeline_mode = #tpu.pipeline_mode<synchronous>, transform_indices = @transform_5, window_bounds = array<i64: 128, 128>}, {transform_indices = @transform_6, window_bounds = array<i64: 1, 128, 128>}]} {
    %c0 = arith.constant 0 : index
    %c0_0 = arith.constant 0 : index
    %c0_1 = arith.constant 0 : index
    %0 = vector.load %arg3[%c0, %c0_0, %c0_1] : memref<1x128x128xf32, #tpu.memory_space<vmem>>, vector<1x128x128xf32>
    %1 = vector.shape_cast %0 : vector<1x128x128xf32> to vector<128x128xf32>
    %2 = tpu.iota {dimensions = array<i32: 0>} : vector<128x1xi32>
    %3 = tpu.iota {dimensions = array<i32: 1>} : vector<1x128xi32>
    %c1_i32 = arith.constant 1 : i32
    %4 = tpu.dynamic_rotate %1 by %c1_i32 dim 0 : vector<128x128xf32>, i32 -> vector<128x128xf32>
    %c127_i32 = arith.constant 127 : i32
    %5 = tpu.dynamic_rotate %1 by %c127_i32 dim 0 : vector<128x128xf32>, i32 -> vector<128x128xf32>
    %cst = arith.constant 2.000000e+00 : f32
    %6 = vector.broadcast %cst : f32 to vector<128x128xf32>
    %7 = arith.mulf %6, %1 : vector<128x128xf32>
    %8 = arith.addf %4, %5 : vector<128x128xf32>
    %cst_2 = arith.constant -1.000000e+00 : f32
    %9 = vector.broadcast %cst_2 : f32 to vector<128x128xf32>
    %10 = arith.mulf %9, %8 : vector<128x128xf32>
    %11 = arith.addf %7, %10 : vector<128x128xf32>
    %c1_i32_3 = arith.constant 1 : i32
    %12 = tpu.dynamic_rotate %11 by %c1_i32_3 dim 1 : vector<128x128xf32>, i32 -> vector<128x128xf32>
    %c127_i32_4 = arith.constant 127 : i32
    %13 = tpu.dynamic_rotate %11 by %c127_i32_4 dim 1 : vector<128x128xf32>, i32 -> vector<128x128xf32>
    %cst_5 = arith.constant 2.000000e+00 : f32
    %14 = vector.broadcast %cst_5 : f32 to vector<128x128xf32>
    %15 = arith.mulf %14, %11 : vector<128x128xf32>
    %16 = arith.addf %12, %13 : vector<128x128xf32>
    %cst_6 = arith.constant -1.000000e+00 : f32
    %17 = vector.broadcast %cst_6 : f32 to vector<128x128xf32>
    %18 = arith.mulf %17, %16 : vector<128x128xf32>
    %19 = arith.addf %15, %18 : vector<128x128xf32>
    %20 = math.absf %19 : vector<128x128xf32>
    %c16_i32 = arith.constant 16 : i32
    %21 = vector.broadcast %c16_i32 : i32 to vector<128x1xi32>
    %22 = arith.cmpi slt, %2, %21 : vector<128x1xi32>
    %c16_i32_7 = arith.constant 16 : i32
    %23 = vector.broadcast %c16_i32_7 : i32 to vector<1x128xi32>
    %24 = arith.cmpi slt, %3, %23 : vector<1x128xi32>
    %25 = vector.broadcast %22 : vector<128x1xi1> to vector<128x128xi1>
    %26 = vector.broadcast %24 : vector<1x128xi1> to vector<128x128xi1>
    %27 = arith.andi %25, %26 : vector<128x128xi1>
    %cst_8 = arith.constant 0.000000e+00 : f32
    %28 = vector.broadcast %cst_8 : f32 to vector<128x128xf32>
    %29 = arith.select %27, %20, %28 : vector<128x128xi1>, vector<128x128xf32>
    %c1_i32_9 = arith.constant 1 : i32
    %30 = tpu.dynamic_rotate %29 by %c1_i32_9 dim 0 : vector<128x128xf32>, i32 -> vector<128x128xf32>
    %c127_i32_10 = arith.constant 127 : i32
    %31 = tpu.dynamic_rotate %29 by %c127_i32_10 dim 0 : vector<128x128xf32>, i32 -> vector<128x128xf32>
    %cst_11 = arith.constant 1.000000e+00 : f32
    %32 = vector.broadcast %cst_11 : f32 to vector<128x128xf32>
    %33 = arith.mulf %32, %29 : vector<128x128xf32>
    %34 = arith.addf %30, %31 : vector<128x128xf32>
    %cst_12 = arith.constant 1.000000e+00 : f32
    %35 = vector.broadcast %cst_12 : f32 to vector<128x128xf32>
    %36 = arith.mulf %35, %34 : vector<128x128xf32>
    %37 = arith.addf %33, %36 : vector<128x128xf32>
    %c1_i32_13 = arith.constant 1 : i32
    %38 = tpu.dynamic_rotate %37 by %c1_i32_13 dim 1 : vector<128x128xf32>, i32 -> vector<128x128xf32>
    %c127_i32_14 = arith.constant 127 : i32
    %39 = tpu.dynamic_rotate %37 by %c127_i32_14 dim 1 : vector<128x128xf32>, i32 -> vector<128x128xf32>
    %cst_15 = arith.constant 1.000000e+00 : f32
    %40 = vector.broadcast %cst_15 : f32 to vector<128x128xf32>
    %41 = arith.mulf %40, %37 : vector<128x128xf32>
    %42 = arith.addf %38, %39 : vector<128x128xf32>
    %cst_16 = arith.constant 1.000000e+00 : f32
    %43 = vector.broadcast %cst_16 : f32 to vector<128x128xf32>
    %44 = arith.mulf %43, %42 : vector<128x128xf32>
    %45 = arith.addf %41, %44 : vector<128x128xf32>
    %cst_17 = arith.constant 0.111111112 : f32
    %46 = vector.broadcast %cst_17 : f32 to vector<128x128xf32>
    %47 = arith.mulf %45, %46 : vector<128x128xf32>
    %cst_18 = arith.constant 1.000000e-10 : f32
    %48 = vector.broadcast %cst_18 : f32 to vector<128x128xf32>
    %49 = arith.addf %47, %48 : vector<128x128xf32>
    %50 = tpu.reciprocal %49 {approx = true} : vector<128x128xf32> -> vector<128x128xf32>
    %cst_19 = arith.constant 1.000000e+10 : f32
    %51 = vector.broadcast %cst_19 : f32 to vector<128x128xf32>
    %52 = arith.minimumf %50, %51 : vector<128x128xf32>
    %c0_20 = arith.constant 0 : index
    %c0_21 = arith.constant 0 : index
    %53 = vector.load %arg5[%c0_20, %c0_21] : memref<128x128xf32, #tpu.memory_space<vmem>>, vector<128x128xf32>
    %cst_22 = arith.constant dense<0.000000e+00> : vector<128x128xf32>
    %54 = tpu.matmul %53, %52, %cst_22 {dimension_numbers = #tpu.dot_dimension_numbers<[1], [0], [0], [1], [0, 0, 1, 1], [], []>} : vector<128x128xf32>, vector<128x128xf32>, vector<128x128xf32> -> vector<128x128xf32>
    %c0_23 = arith.constant 0 : index
    %c0_24 = arith.constant 0 : index
    %55 = vector.load %arg6[%c0_23, %c0_24] : memref<128x128xf32, #tpu.memory_space<vmem>>, vector<128x128xf32>
    %cst_25 = arith.constant dense<0.000000e+00> : vector<128x128xf32>
    %56 = tpu.matmul %54, %55, %cst_25 {dimension_numbers = #tpu.dot_dimension_numbers<[1], [0], [0], [1], [0, 0, 1, 1], [], []>} : vector<128x128xf32>, vector<128x128xf32>, vector<128x128xf32> -> vector<128x128xf32>
    %cst_26 = arith.constant 1.000000e+10 : f32
    %57 = vector.broadcast %cst_26 : f32 to vector<128x128xf32>
    %58 = arith.select %27, %56, %57 : vector<128x128xi1>, vector<128x128xf32>
    %c0_27 = arith.constant 0 : index
    %59 = memref.load %arg1[%c0_27] : memref<1xf32, #tpu.memory_space<smem>>
    %c0_28 = arith.constant 0 : index
    %60 = memref.load %arg2[%c0_28] : memref<1xi32, #tpu.memory_space<smem>>
    %61 = arith.sitofp %60 : i32 to f32
    %62 = arith.mulf %59, %61 : f32
    %63 = arith.divf %62, %61 : f32
    %cst_29 = arith.constant 0.000000e+00 : f32
    %cst_30 = arith.constant 1.000000e+03 : f32
    %64 = arith.subf %cst_29, %cst_30 : f32
    %65 = vector.broadcast %64 : f32 to vector<128x128xf32>
    %66 = arith.mulf %65, %58 : vector<128x128xf32>
    %67 = math.exp %66 : vector<128x128xf32>
    %cst_31 = arith.constant 1.000000e+00 : f32
    %68 = arith.addf %62, %cst_31 : f32
    %cst_32 = arith.constant 1.000000e+03 : f32
    %c0_i32 = arith.constant 0 : i32
    %69:4 = scf.while (%arg8 = %cst_32, %arg9 = %67, %arg10 = %68, %arg11 = %c0_i32) : (f32, vector<128x128xf32>, f32, i32) -> (f32, vector<128x128xf32>, f32, i32) {
      %98 = arith.cmpf ogt, %arg10, %62 : f32
      %c10_i32_48 = arith.constant 10 : i32
      %99 = arith.cmpi sle, %arg11, %c10_i32_48 : i32
      %100 = arith.andi %98, %99 : i1
      scf.condition(%100) %arg8, %arg9, %arg10, %arg11 : f32, vector<128x128xf32>, f32, i32
    } do {
    ^bb0(%arg8: f32, %arg9: vector<128x128xf32>, %arg10: f32, %arg11: i32):
      %cst_48 = arith.constant 2.000000e+00 : f32
      %98 = arith.mulf %arg8, %cst_48 : f32
      %99 = arith.mulf %arg9, %arg9 : vector<128x128xf32>
      %cst_49 = arith.constant 2.000000e+00 : f32
      %100 = vector.broadcast %cst_49 : f32 to vector<128x128xf32>
      %101 = arith.mulf %100, %99 : vector<128x128xf32>
      %cst_50 = arith.constant 1.000000e+00 : f32
      %102 = vector.broadcast %cst_50 : f32 to vector<128x128xf32>
      %103 = arith.addf %102, %101 : vector<128x128xf32>
      %cst_51 = arith.constant 2.000000e+00 : f32
      %104 = vector.broadcast %cst_51 : f32 to vector<128x128xf32>
      %105 = arith.mulf %104, %99 : vector<128x128xf32>
      %106 = tpu.reciprocal %103 {approx = true} : vector<128x128xf32> -> vector<128x128xf32>
      %107 = arith.mulf %105, %106 : vector<128x128xf32>
      %108 = math.log %103 : vector<128x128xf32>
      %cst_52 = arith.constant 2.000000e+00 : f32
      %109 = math.log %cst_52 : f32
      %110 = vector.broadcast %109 : f32 to vector<128x128xf32>
      %111 = arith.divf %108, %110 : vector<128x128xf32>
      %cst_53 = arith.constant 1.44269502 : f32
      %112 = arith.mulf %98, %cst_53 : f32
      %113 = arith.mulf %58, %107 : vector<128x128xf32>
      %114 = vector.broadcast %112 : f32 to vector<128x128xf32>
      %115 = arith.mulf %114, %113 : vector<128x128xf32>
      %116 = arith.addf %111, %115 : vector<128x128xf32>
      %cst_54 = arith.constant dense<0.000000e+00> : vector<128xf32>
      %117 = vector.multi_reduction <add>, %116, %cst_54 [1] : vector<128x128xf32> to vector<128xf32>
      %118 = vector.shape_cast %117 : vector<128xf32> to vector<128x1xf32>
      %119 = vector.shape_cast %118 : vector<128x1xf32> to vector<1x128x1xf32>
      %cst_55 = arith.constant dense<0.000000e+00> : vector<1xf32>
      %120 = vector.multi_reduction <add>, %119, %cst_55 [1, 2] : vector<1x128x1xf32> to vector<1xf32>
      %121 = vector.shape_cast %120 : vector<1xf32> to vector<1x1x1xf32>
      %122 = vector.extract %121[0, 0, 0] : f32 from vector<1x1x1xf32>
      %c1_i32_56 = arith.constant 1 : i32
      %123 = arith.addi %arg11, %c1_i32_56 : i32
      scf.yield %98, %99, %122, %123 : f32, vector<128x128xf32>, f32, i32
    }
    %c10_i32 = arith.constant 10 : i32
    %70 = arith.cmpi sgt, %69#3, %c10_i32 : i32
    %cst_33 = arith.constant 0.000000e+00 : f32
    %cst_34 = arith.constant 0.000000e+00 : f32
    %71:6 = scf.while (%arg8 = %cst_33, %arg9 = %69#0, %arg10 = %61, %arg11 = %69#2, %arg12 = %cst_34, %arg13 = %69#3) : (f32, f32, f32, f32, f32, i32) -> (f32, f32, f32, f32, f32, i32) {
      %98 = arith.subf %arg10, %arg11 : f32
      %99 = arith.divf %98, %61 : f32
      %cst_48 = arith.constant 1.000000e+03 : f32
      %100 = arith.divf %63, %cst_48 : f32
      %101 = arith.cmpf ogt, %99, %100 : f32
      %c30_i32 = arith.constant 30 : i32
      %102 = arith.cmpi slt, %arg13, %c30_i32 : i32
      %103 = arith.andi %101, %102 : i1
      %true = arith.constant true
      %104 = arith.xori %70, %true : i1
      %105 = arith.andi %103, %104 : i1
      scf.condition(%105) %arg8, %arg9, %arg10, %arg11, %arg12, %arg13 : f32, f32, f32, f32, f32, i32
    } do {
    ^bb0(%arg8: f32, %arg9: f32, %arg10: f32, %arg11: f32, %arg12: f32, %arg13: i32):
      %98 = arith.subf %arg9, %arg8 : f32
      %cst_48 = arith.constant 5.000000e-01 : f32
      %99 = arith.mulf %98, %cst_48 : f32
      %100 = arith.addf %arg8, %99 : f32
      %cst_49 = arith.constant 0.000000e+00 : f32
      %101 = arith.subf %cst_49, %100 : f32
      %102 = vector.broadcast %101 : f32 to vector<128x128xf32>
      %103 = arith.mulf %102, %58 : vector<128x128xf32>
      %104 = math.exp %103 : vector<128x128xf32>
      %cst_50 = arith.constant 2.000000e+00 : f32
      %105 = vector.broadcast %cst_50 : f32 to vector<128x128xf32>
      %106 = arith.mulf %105, %104 : vector<128x128xf32>
      %cst_51 = arith.constant 1.000000e+00 : f32
      %107 = vector.broadcast %cst_51 : f32 to vector<128x128xf32>
      %108 = arith.addf %107, %106 : vector<128x128xf32>
      %cst_52 = arith.constant 2.000000e+00 : f32
      %109 = vector.broadcast %cst_52 : f32 to vector<128x128xf32>
      %110 = arith.mulf %109, %104 : vector<128x128xf32>
      %111 = tpu.reciprocal %108 {approx = true} : vector<128x128xf32> -> vector<128x128xf32>
      %112 = arith.mulf %110, %111 : vector<128x128xf32>
      %113 = math.log %108 : vector<128x128xf32>
      %cst_53 = arith.constant 2.000000e+00 : f32
      %114 = math.log %cst_53 : f32
      %115 = vector.broadcast %114 : f32 to vector<128x128xf32>
      %116 = arith.divf %113, %115 : vector<128x128xf32>
      %cst_54 = arith.constant 1.44269502 : f32
      %117 = arith.mulf %100, %cst_54 : f32
      %118 = arith.mulf %58, %112 : vector<128x128xf32>
      %119 = vector.broadcast %117 : f32 to vector<128x128xf32>
      %120 = arith.mulf %119, %118 : vector<128x128xf32>
      %121 = arith.addf %116, %120 : vector<128x128xf32>
      %cst_55 = arith.constant dense<0.000000e+00> : vector<128xf32>
      %122 = vector.multi_reduction <add>, %121, %cst_55 [1] : vector<128x128xf32> to vector<128xf32>
      %123 = vector.shape_cast %122 : vector<128xf32> to vector<128x1xf32>
      %124 = vector.shape_cast %123 : vector<128x1xf32> to vector<1x128x1xf32>
      %cst_56 = arith.constant dense<0.000000e+00> : vector<1xf32>
      %125 = vector.multi_reduction <add>, %124, %cst_56 [1, 2] : vector<1x128x1xf32> to vector<1xf32>
      %126 = vector.shape_cast %125 : vector<1xf32> to vector<1x1x1xf32>
      %127 = vector.extract %126[0, 0, 0] : f32 from vector<1x1x1xf32>
      %128 = arith.cmpf olt, %127, %62 : f32
      %129 = arith.select %128, %100, %arg9 : f32
      %130 = arith.select %128, %127, %arg11 : f32
      %131 = arith.select %128, %arg8, %100 : f32
      %132 = arith.select %128, %arg10, %127 : f32
      %c1_i32_57 = arith.constant 1 : i32
      %133 = arith.addi %arg13, %c1_i32_57 : i32
      scf.yield %131, %129, %132, %130, %100, %133 : f32, f32, f32, f32, f32, i32
    }
    %72 = arith.select %70, %69#0, %71#4 : f32
    %cst_35 = arith.constant 0.000000e+00 : f32
    %73 = arith.subf %cst_35, %72 : f32
    %74 = vector.broadcast %73 : f32 to vector<128x128xf32>
    %75 = arith.mulf %74, %58 : vector<128x128xf32>
    %76 = math.exp %75 : vector<128x128xf32>
    %cst_36 = arith.constant 2.000000e+00 : f32
    %77 = vector.broadcast %cst_36 : f32 to vector<128x128xf32>
    %78 = arith.mulf %77, %76 : vector<128x128xf32>
    %cst_37 = arith.constant 1.000000e+00 : f32
    %79 = vector.broadcast %cst_37 : f32 to vector<128x128xf32>
    %80 = arith.addf %79, %78 : vector<128x128xf32>
    %81 = tpu.reciprocal %80 {approx = true} : vector<128x128xf32> -> vector<128x128xf32>
    %82 = arith.mulf %76, %81 : vector<128x128xf32>
    %c0_38 = arith.constant 0 : index
    %c0_39 = arith.constant 0 : index
    %c0_40 = arith.constant 0 : index
    %83 = vector.load %arg4[%c0_38, %c0_39, %c0_40] : memref<1x128x128xf32, #tpu.memory_space<vmem>>, vector<1x128x128xf32>
    %84 = vector.shape_cast %83 : vector<1x128x128xf32> to vector<128x128xf32>
    %85 = arith.cmpf olt, %84, %82 : vector<128x128xf32>
    %cst_41 = arith.constant 1.000000e+00 : f32
    %86 = vector.broadcast %cst_41 : f32 to vector<128x128xf32>
    %87 = arith.subf %86, %82 : vector<128x128xf32>
    %88 = arith.cmpf oge, %84, %87 : vector<128x128xf32>
    %cst_42 = arith.constant -1.000000e+00 : f32
    %cst_43 = arith.constant 0.000000e+00 : f32
    %89 = vector.broadcast %cst_42 : f32 to vector<128x128xf32>
    %90 = vector.broadcast %cst_43 : f32 to vector<128x128xf32>
    %91 = arith.select %88, %89, %90 : vector<128x128xi1>, vector<128x128xf32>
    %cst_44 = arith.constant 1.000000e+00 : f32
    %92 = vector.broadcast %cst_44 : f32 to vector<128x128xf32>
    %93 = arith.select %85, %92, %91 : vector<128x128xi1>, vector<128x128xf32>
    %94 = arith.addf %93, %1 : vector<128x128xf32>
    %c0_45 = arith.constant 0 : index
    %c0_46 = arith.constant 0 : index
    %c0_47 = arith.constant 0 : index
    %95 = vector.load %arg7[%c0_45, %c0_46, %c0_47] : memref<1x128x128xf32, #tpu.memory_space<vmem>>, vector<1x128x128xf32>
    %96 = vector.shape_cast %95 : vector<1x128x128xf32> to vector<128x128xf32>
    %97 = vector.shape_cast %94 : vector<128x128xf32> to vector<1x128x128xf32>
    tpu.vector_store %arg7[%c0_45, %c0_46, %c0_47], %97 {strides = array<i32>} : memref<1x128x128xf32, #tpu.memory_space<vmem>>, vector<1x128x128xf32>,
    return
  }
  func.func @transform_0(%arg0: i32) -> i32 {
    %c0_i32 = arith.constant 0 : i32
    %c0_i32_0 = arith.constant 0 : i32
    return %c0_i32 : i32
  }
  func.func @transform_1(%arg0: i32) -> i32 {
    %c0_i32 = arith.constant 0 : i32
    %c0_i32_0 = arith.constant 0 : i32
    return %c0_i32 : i32
  }
  func.func @transform_2(%arg0: i32) -> (i32, i32, i32) {
    %c0_i32 = arith.constant 0 : i32
    %c0_i32_0 = arith.constant 0 : i32
    %c0_i32_1 = arith.constant 0 : i32
    return %arg0, %c0_i32, %c0_i32_0 : i32, i32, i32
  }
  func.func @transform_3(%arg0: i32) -> (i32, i32, i32) {
    %c0_i32 = arith.constant 0 : i32
    %c0_i32_0 = arith.constant 0 : i32
    %c0_i32_1 = arith.constant 0 : i32
    return %arg0, %c0_i32, %c0_i32_0 : i32, i32, i32
  }
  func.func @transform_4(%arg0: i32) -> (i32, i32) {
    %c0_i32 = arith.constant 0 : i32
    %c0_i32_0 = arith.constant 0 : i32
    %c0_i32_1 = arith.constant 0 : i32
    return %c0_i32, %c0_i32_0 : i32, i32
  }
  func.func @transform_5(%arg0: i32) -> (i32, i32) {
    %c0_i32 = arith.constant 0 : i32
    %c0_i32_0 = arith.constant 0 : i32
    %c0_i32_1 = arith.constant 0 : i32
    return %c0_i32, %c0_i32_0 : i32, i32
  }
  func.func @transform_6(%arg0: i32) -> (i32, i32, i32) {
    %c0_i32 = arith.constant 0 : i32
    %c0_i32_0 = arith.constant 0 : i32
    %c0_i32_1 = arith.constant 0 : i32
    return %arg0, %c0_i32, %c0_i32_0 : i32, i32, i32
  }
}

</mosaic_0001>

<llo_original>
// kernel: tpu_custom_call.1
$region0: #{tpu_custom_call.1}
  #allocation0 [shape = 'u32[]', space=smem, size = 0x4, offset = 0x4, fixed_abs, tag = 'smem constant byte address 0x4 - core index']
  #allocation1 [shape = 'u32[144,128]{1,0:T(1,128)}', space=vmem, size = 0x12000, scoped, tag = 'internal scratch']
  #allocation2 [shape = 'f32[1]{0:T(128)S(6)}', space=smem, size = 0x200, scoped, tag = 'scoped memory for tpu_custom_call.1']
  #allocation3 [shape = 's32[1]{0:T(128)S(6)}', space=smem, size = 0x200, scoped, tag = 'scoped memory for tpu_custom_call.1']
  %s0 = inlined_call_operand.<no memory space> [shape: f32[1], index: 0, kind: input, shape index: {}]
  %s1 = inlined_call_operand.<no memory space> [shape: s32[1], index: 1, kind: input, shape index: {}]
  %s2 = inlined_call_operand.hbm [shape: f32[2,128,128], index: 2, kind: input, shape index: {}]
  %s3 = inlined_call_operand.hbm [shape: f32[2,128,128], index: 3, kind: input, shape index: {}]
  %s4 = inlined_call_operand.hbm [shape: f32[128,128], index: 4, kind: input, shape index: {}]
  %s5 = inlined_call_operand.hbm [shape: f32[128,128], index: 5, kind: input, shape index: {}]
  %s6 = inlined_call_operand.hbm [shape: f32[2,128,128], index: 6, kind: output, shape index: {}]
  %s7 = sld [smem:[#allocation0]]
  $region87: #{tpu_custom_call.1} parent=0
    _
  %s9 = ssub.s32 1, %s7
  %s10 = scalar_select 0, %s9, %s7
  %11 = sst [smem:[#allocation2]] %s0
  %12 = sst [smem:[#allocation3]] %s1
  $region1: #{tpu_custom_call.1} parent=0
    #allocation4 [shape = 'u8[131072]{0}', space=vmem, size = 0x20000, scoped, tag = 'input window, operand 2']
    #allocation5 [shape = 's32[2]{0}', space=sflag, size = 0x8, scoped, tag = 'scoped memory for tpu_custom_call.1']
    #allocation6 [shape = 's32[2]{0}', space=sflag, size = 0x8, scoped, tag = 'scoped memory for tpu_custom_call.1']
    #allocation7 [shape = 'u8[131072]{0}', space=vmem, size = 0x20000, scoped, tag = 'input window, operand 3']
    #allocation8 [shape = 's32[2]{0}', space=sflag, size = 0x8, scoped, tag = 'scoped memory for tpu_custom_call.1']
    #allocation9 [shape = 'u8[65536]{0}', space=vmem, size = 0x10000, scoped, tag = 'input window, operand 4, single buffered']
    #allocation10 [shape = 'u8[65536]{0}', space=vmem, size = 0x10000, scoped, tag = 'input window, operand 5, single buffered']
    #allocation11 [shape = 's32[1]{0}', space=sflag, size = 0x4, scoped, tag = 'scoped memory for tpu_custom_call.1']
    #allocation12 [shape = 'u8[131072]{0}', space=vmem, size = 0x20000, scoped, tag = 'output window, operand 0']
    %13 = vsyncpa [#allocation5], 0
    %s14 = scalar_lea.sflag [#allocation5], 1
    %15 = vsyncpa %s14, 0
    %16 = vsyncpa [#allocation8], 0
    %s17 = scalar_lea.sflag [#allocation8], 1
    %18 = vsyncpa %s17, 0
    %19 = vsyncpa [#allocation11], 0
    %20 = vsyncpa [#allocation6], 0
    %s21 = scalar_lea.sflag [#allocation6], 1
    %22 = vsyncpa %s21, 0
    loop: start=0, step=1, limit=4
    $region2: #{tpu_custom_call.1} parent=1 // loop_pre_header
      _
    $region3: #{tpu_custom_call.1} parent=1 // loop_header
      %s24 = sphi 0, %s28
      %p25 = scmp.ge.s32.totalorder %s24, 4
      %s32 = sphi 0, %s32
      %s34 = sphi 0, %s32
      %s35 = sphi 0, %s34
      %s49 = sphi 0, %s35
      %s53 = sphi 0, %s53
      %s55 = sphi 0, %s53
      %s56 = sphi 0, %s55
      %s70 = sphi 0, %s56
      %s76 = sphi 0, %s78
      %s79 = sphi 0, %s76
      %s80 = sphi 0, %s79
      %s96 = sphi 0, %s80
      %s102 = sphi 0, %s104
      %s105 = sphi 0, %s102
      %s106 = sphi 0, %s105
      %s122 = sphi 0, %s106
      %s126 = sphi 0, %s126
      %s128 = sphi 0, %s126
      %s129 = sphi 0, %s128
      %s143 = sphi 0, %s129
      %s147 = sphi 0, %s147
      %s149 = sphi 0, %s147
      %s150 = sphi 0, %s149
      %s164 = sphi 0, %s150
      %s170 = sphi 0, %s172
      %s173 = sphi 0, %s170
      %s174 = sphi 0, %s173
      %s190 = sphi 0, %s174
    $region4: #{tpu_custom_call.1} parent=1 // loop_header_branch
      %27 = sbr.rel (%p25) target = $region8
    $region5: #{tpu_custom_call.1} parent=1 // loop_body
      %s29 = ssub.s32 %s24, 1
      %s30 = ssub.s32 %s24, 2
      %s31 = sadd.s32 %s24, 1
      %s33 = sadd.s32 %s32, 1
      %p36 = scmp.eq.s32.totalorder %s24, 1
      %p37 = scmp.ne.s32.totalorder %s32, %s34
      %p38 = scmp.eq.s32.totalorder %s24, 0
      %p39 = por %p37, %p38
      %p40 = scmp.ne.s32.totalorder %s32, %s34
      %p41 = scmp.eq.s32.totalorder %s29, 1
      %p42 = por %p40, %p41
      %p43 = scmp.ne.s32.totalorder %s34, %s35
      %p44 = scmp.eq.s32.totalorder %s29, 0
      %p45 = por %p43, %p44
      %p46 = scmp.ne.s32.totalorder %s34, %s35
      %p47 = scmp.eq.s32.totalorder %s30, 1
      %p48 = por %p46, %p47
      %p50 = scmp.ne.s32.totalorder %s35, %s49
      %p51 = scmp.eq.s32.totalorder %s30, 0
      %p52 = por %p50, %p51
      %s54 = sadd.s32 %s53, 1
      %p57 = scmp.eq.s32.totalorder %s24, 1
      %p58 = scmp.ne.s32.totalorder %s53, %s55
      %p59 = scmp.eq.s32.totalorder %s24, 0
      %p60 = por %p58, %p59
      %p61 = scmp.ne.s32.totalorder %s53, %s55
      %p62 = scmp.eq.s32.totalorder %s29, 1
      %p63 = por %p61, %p62
      %p64 = scmp.ne.s32.totalorder %s55, %s56
      %p65 = scmp.eq.s32.totalorder %s29, 0
      %p66 = por %p64, %p65
      %p67 = scmp.ne.s32.totalorder %s55, %s56
      %p68 = scmp.eq.s32.totalorder %s30, 1
      %p69 = por %p67, %p68
      %p71 = scmp.ne.s32.totalorder %s56, %s70
      %p72 = scmp.eq.s32.totalorder %s30, 0
      %p73 = por %p71, %p72
      %s74 = ssub.s32 %s24, %s31
      %p75 = scmp.eq.s32.totalorder %s74, 0
      %s77 = sadd.s32 %s76, 1
      %s78 = scalar_select %p75, %s76, %s77
      %p81 = pneg %p75
      %p82 = scmp.eq.s32.totalorder %s24, 1
      %p83 = por %p81, %p82
      %p84 = scmp.ne.s32.totalorder %s76, %s79
      %p85 = scmp.eq.s32.totalorder %s24, 0
      %p86 = por %p84, %p85
      %p87 = scmp.ne.s32.totalorder %s76, %s79
      %p88 = scmp.eq.s32.totalorder %s29, 1
      %p89 = por %p87, %p88
      %p90 = scmp.ne.s32.totalorder %s79, %s80
      %p91 = scmp.eq.s32.totalorder %s29, 0
      %p92 = por %p90, %p91
      %p93 = scmp.ne.s32.totalorder %s79, %s80
      %p94 = scmp.eq.s32.totalorder %s30, 1
      %p95 = por %p93, %p94
      %p97 = scmp.ne.s32.totalorder %s80, %s96
      %p98 = scmp.eq.s32.totalorder %s30, 0
      %p99 = por %p97, %p98
      %s100 = ssub.s32 %s24, %s31
      %p101 = scmp.eq.s32.totalorder %s100, 0
      %s103 = sadd.s32 %s102, 1
      %s104 = scalar_select %p101, %s102, %s103
      %p107 = pneg %p101
      %p108 = scmp.eq.s32.totalorder %s24, 1
      %p109 = por %p107, %p108
      %p110 = scmp.ne.s32.totalorder %s102, %s105
      %p111 = scmp.eq.s32.totalorder %s24, 0
      %p112 = por %p110, %p111
      %p113 = scmp.ne.s32.totalorder %s102, %s105
      %p114 = scmp.eq.s32.totalorder %s29, 1
      %p115 = por %p113, %p114
      %p116 = scmp.ne.s32.totalorder %s105, %s106
      %p117 = scmp.eq.s32.totalorder %s29, 0
      %p118 = por %p116, %p117
      %p119 = scmp.ne.s32.totalorder %s105, %s106
      %p120 = scmp.eq.s32.totalorder %s30, 1
      %p121 = por %p119, %p120
      %p123 = scmp.ne.s32.totalorder %s106, %s122
      %p124 = scmp.eq.s32.totalorder %s30, 0
      %p125 = por %p123, %p124
      %s127 = sadd.s32 %s126, 1
      %p130 = scmp.eq.s32.totalorder %s24, 1
      %p131 = scmp.ne.s32.totalorder %s126, %s128
      %p132 = scmp.eq.s32.totalorder %s24, 0
      %p133 = por %p131, %p132
      %p134 = scmp.ne.s32.totalorder %s126, %s128
      %p135 = scmp.eq.s32.totalorder %s29, 1
      %p136 = por %p134, %p135
      %p137 = scmp.ne.s32.totalorder %s128, %s129
      %p138 = scmp.eq.s32.totalorder %s29, 0
      %p139 = por %p137, %p138
      %p140 = scmp.ne.s32.totalorder %s128, %s129
      %p141 = scmp.eq.s32.totalorder %s30, 1
      %p142 = por %p140, %p141
      %p144 = scmp.ne.s32.totalorder %s129, %s143
      %p145 = scmp.eq.s32.totalorder %s30, 0
      %p146 = por %p144, %p145
      %s148 = sadd.s32 %s147, 1
      %p151 = scmp.eq.s32.totalorder %s24, 1
      %p152 = scmp.ne.s32.totalorder %s147, %s149
      %p153 = scmp.eq.s32.totalorder %s24, 0
      %p154 = por %p152, %p153
      %p155 = scmp.ne.s32.totalorder %s147, %s149
      %p156 = scmp.eq.s32.totalorder %s29, 1
      %p157 = por %p155, %p156
      %p158 = scmp.ne.s32.totalorder %s149, %s150
      %p159 = scmp.eq.s32.totalorder %s29, 0
      %p160 = por %p158, %p159
      %p161 = scmp.ne.s32.totalorder %s149, %s150
      %p162 = scmp.eq.s32.totalorder %s30, 1
      %p163 = por %p161, %p162
      %p165 = scmp.ne.s32.totalorder %s150, %s164
      %p166 = scmp.eq.s32.totalorder %s30, 0
      %p167 = por %p165, %p166
      %s168 = ssub.s32 %s24, %s31
      %p169 = scmp.eq.s32.totalorder %s168, 0
      %s171 = sadd.s32 %s170, 1
      %s172 = scalar_select %p169, %s170, %s171
      %p175 = pneg %p169
      %p176 = scmp.eq.s32.totalorder %s24, 1
      %p177 = por %p175, %p176
      %p178 = scmp.ne.s32.totalorder %s170, %s173
      %p179 = scmp.eq.s32.totalorder %s24, 0
      %p180 = por %p178, %p179
      %p181 = scmp.ne.s32.totalorder %s170, %s173
      %p182 = scmp.eq.s32.totalorder %s29, 1
      %p183 = por %p181, %p182
      %p184 = scmp.ne.s32.totalorder %s173, %s174
      %p185 = scmp.eq.s32.totalorder %s29, 0
      %p186 = por %p184, %p185
      %p187 = scmp.ne.s32.totalorder %s173, %s174
      %p188 = scmp.eq.s32.totalorder %s30, 1
      %p189 = por %p187, %p188
      %p191 = scmp.ne.s32.totalorder %s174, %s190
      %p192 = scmp.eq.s32.totalorder %s30, 0
      %p193 = por %p191, %p192
      %p194 = scmp.le.s32.totalorder 1, %s24
      %p195 = scmp.lt.s32.totalorder %s24, 3
      %p196 = pnand %p194, %p195
      %p197 = pneg %p196
      // Predicated region
      $region9: #{tpu_custom_call.1} parent=5 // pred_check
        _
      $region10: #{tpu_custom_call.1} parent=5 // pred_check_branch
        %199 = sbr.rel (%p196) target = $region12
      $region11: #{tpu_custom_call.1} parent=5 // pred_region
        %s200 = ssub.s32 %s24, 1
        // Predicated region
        $region13: #{tpu_custom_call.1} parent=11 // pred_check
          %p201 = pneg %p45
        $region14: #{tpu_custom_call.1} parent=11 // pred_check_branch
          %203 = sbr.rel (%p201) target = $region16
        $region15: #{tpu_custom_call.1} parent=11 // pred_region
          _
        $region16: #{tpu_custom_call.1} parent=11 // pred_fallthru
          _
        // Predicated region
        $region17: #{tpu_custom_call.1} parent=11 // pred_check
          %p204 = pneg %p66
        $region18: #{tpu_custom_call.1} parent=11 // pred_check_branch
          %206 = sbr.rel (%p204) target = $region20
        $region19: #{tpu_custom_call.1} parent=11 // pred_region
          _
        $region20: #{tpu_custom_call.1} parent=11 // pred_fallthru
          _
        // Predicated region
        $region21: #{tpu_custom_call.1} parent=11 // pred_check
          %p207 = pneg %p139
        $region22: #{tpu_custom_call.1} parent=11 // pred_check_branch
          %209 = sbr.rel (%p207) target = $region24
        $region23: #{tpu_custom_call.1} parent=11 // pred_region
          %s211 = ssub.s32 2048, 2048
          %212 = vsyncadd [#allocation8], %s211
          %s213 = sshll.u32 [#allocation9], 4
          %s214 = int_to_ptr.vmem [resolvable:$true] %s213
          %219 = dma.hbm_to_vmem [thread:$0]  %s4, 2048, %s214, [#allocation8], 128, 128, 8
        $region24: #{tpu_custom_call.1} parent=11 // pred_fallthru
          _
        // Predicated region
        $region25: #{tpu_custom_call.1} parent=11 // pred_check
          %p220 = pneg %p160
        $region26: #{tpu_custom_call.1} parent=11 // pred_check_branch
          %222 = sbr.rel (%p220) target = $region28
        $region27: #{tpu_custom_call.1} parent=11 // pred_region
          %s224 = ssub.s32 2048, 2048
          %225 = vsyncadd [#allocation11], %s224
          %s226 = sshll.u32 [#allocation10], 4
          %s227 = int_to_ptr.vmem [resolvable:$true] %s226
          %232 = dma.hbm_to_vmem [thread:$0]  %s5, 2048, %s227, [#allocation11], 128, 128, 8
        $region28: #{tpu_custom_call.1} parent=11 // pred_fallthru
          _
      $region12: #{tpu_custom_call.1} parent=5 // pred_fallthru
        _
      %p233 = scmp.lt.s32.totalorder %s24, 2
      // Predicated region
      $region29: #{tpu_custom_call.1} parent=5 // pred_check
        %p234 = pneg %p233
      $region30: #{tpu_custom_call.1} parent=5 // pred_check_branch
        %236 = sbr.rel (%p234) target = $region32
      $region31: #{tpu_custom_call.1} parent=5 // pred_region
        // Predicated region
        $region33: #{tpu_custom_call.1} parent=31 // pred_check
          %p237 = pneg %p86
        $region34: #{tpu_custom_call.1} parent=31 // pred_check_branch
          %239 = sbr.rel (%p237) target = $region36
        $region35: #{tpu_custom_call.1} parent=31 // pred_region
          %s240 = sand.u32 %s76, 1
          %s241 = scalar_lea.sflag [#allocation5], %s240
          %s242 = sand.u32 %s76, 1
          %s243 = smul.addr %s242, 128
          %s244 = scalar_lea.vmem [#allocation4], %s243
          %s246 = ssub.s32 2048, 2048
          %247 = vsyncadd %s241, %s246
          %s248 = smul.addr %s24, 16
          %s249 = smul.addr %s248, 128
          %s250 = scalar_lea.hbm %s2, %s249
          %s251 = sshll.u32 %s244, 4
          %s252 = int_to_ptr.vmem [resolvable:$true] %s251
          %257 = dma.hbm_to_vmem [thread:$0]  %s250, 2048, %s252, %s241, 128, 128, 8
        $region36: #{tpu_custom_call.1} parent=31 // pred_fallthru
          _
        // Predicated region
        $region37: #{tpu_custom_call.1} parent=31 // pred_check
          %p258 = pneg %p112
        $region38: #{tpu_custom_call.1} parent=31 // pred_check_branch
          %260 = sbr.rel (%p258) target = $region40
        $region39: #{tpu_custom_call.1} parent=31 // pred_region
          %s261 = sand.u32 %s24, 1
          %s262 = scalar_lea.sflag [#allocation8], %s261
          %s263 = sand.u32 %s102, 1
          %s264 = smul.addr %s263, 128
          %s265 = scalar_lea.vmem [#allocation7], %s264
          %s267 = ssub.s32 2048, 2048
          %268 = vsyncadd %s262, %s267
          %s269 = smul.addr %s24, 16
          %s270 = smul.addr %s269, 128
          %s271 = scalar_lea.hbm %s3, %s270
          %s272 = sshll.u32 %s265, 4
          %s273 = int_to_ptr.vmem [resolvable:$true] %s272
          %278 = dma.hbm_to_vmem [thread:$0]  %s271, 2048, %s273, %s262, 128, 128, 8
        $region40: #{tpu_custom_call.1} parent=31 // pred_fallthru
          _
      $region32: #{tpu_custom_call.1} parent=5 // pred_fallthru
        _
      %p279 = scmp.le.s32.totalorder 1, %s24
      %p280 = scmp.lt.s32.totalorder %s24, 3
      %p281 = pnand %p279, %p280
      %p282 = pneg %p281
      // Predicated region
      $region41: #{tpu_custom_call.1} parent=5 // pred_check
        _
      $region42: #{tpu_custom_call.1} parent=5 // pred_check_branch
        %284 = sbr.rel (%p281) target = $region44
      $region43: #{tpu_custom_call.1} parent=5 // pred_region
        %s285 = ssub.s32 %s24, 1
        %s286 = sand.u32 %s79, 1
        %s287 = scalar_lea.sflag [#allocation5], %s286
        %s288 = sand.u32 %s79, 1
        %s289 = smul.addr %s288, 128
        %s290 = scalar_lea.vmem [#allocation4], %s289
        // Predicated region
        $region45: #{tpu_custom_call.1} parent=43 // pred_check
          %p291 = pneg %p92
        $region46: #{tpu_custom_call.1} parent=43 // pred_check_branch
          %293 = sbr.rel (%p291) target = $region48
        $region47: #{tpu_custom_call.1} parent=43 // pred_region
          %294 = dma.done %s287, 2048
        $region48: #{tpu_custom_call.1} parent=43 // pred_fallthru
          _
        %s295 = sand.u32 %s29, 1
        %s296 = scalar_lea.sflag [#allocation8], %s295
        %s297 = sand.u32 %s105, 1
        %s298 = smul.addr %s297, 128
        %s299 = scalar_lea.vmem [#allocation7], %s298
        // Predicated region
        $region49: #{tpu_custom_call.1} parent=43 // pred_check
          %p300 = pneg %p118
        $region50: #{tpu_custom_call.1} parent=43 // pred_check_branch
          %302 = sbr.rel (%p300) target = $region52
        $region51: #{tpu_custom_call.1} parent=43 // pred_region
          %303 = dma.done %s296, 2048
        $region52: #{tpu_custom_call.1} parent=43 // pred_fallthru
          _
        // Predicated region
        $region53: #{tpu_custom_call.1} parent=43 // pred_check
          %p304 = pneg %p139
        $region54: #{tpu_custom_call.1} parent=43 // pred_check_branch
          %306 = sbr.rel (%p304) target = $region56
        $region55: #{tpu_custom_call.1} parent=43 // pred_region
          %307 = dma.done [#allocation8], 2048
        $region56: #{tpu_custom_call.1} parent=43 // pred_fallthru
          _
        // Predicated region
        $region57: #{tpu_custom_call.1} parent=43 // pred_check
          %p308 = pneg %p160
        $region58: #{tpu_custom_call.1} parent=43 // pred_check_branch
          %310 = sbr.rel (%p308) target = $region60
        $region59: #{tpu_custom_call.1} parent=43 // pred_region
          %311 = dma.done [#allocation11], 2048
        $region60: #{tpu_custom_call.1} parent=43 // pred_fallthru
          _
        %p312 = pneg %p45
        %p313 = pneg %p42
        %p314 = pneg %p66
        %p315 = pneg %p63
        %s316 = sand.u32 %s79, 1
        %s317 = scalar_lea.sflag [#allocation5], %s316
        %s318 = sand.u32 %s79, 1
        %s319 = smul.addr %s318, 128
        %s320 = scalar_lea.vmem [#allocation4], %s319
        %p321 = pneg %p92
        %p322 = pneg %p89
        %s323 = sand.u32 %s29, 1
        %s324 = scalar_lea.sflag [#allocation8], %s323
        %s325 = sand.u32 %s105, 1
        %s326 = smul.addr %s325, 128
        %s327 = scalar_lea.vmem [#allocation7], %s326
        %p328 = pneg %p118
        %p329 = pneg %p115
        %p330 = pneg %p139
        %p331 = pneg %p136
        %p332 = pneg %p160
        %p333 = pneg %p157
        %p334 = pneg %p186
        %p335 = pneg %p183
        %s336 = sand.u32 %s173, 1
        %s337 = scalar_lea.sflag [#allocation6], %s336
        %s338 = sand.u32 %s173, 1
        %s339 = smul.addr %s338, 128
        %s340 = scalar_lea.vmem [#allocation12], %s339
        %v341 = vld [vmem:[%s290] sm:$0xff]
        %v342 = vld [vmem:[%s290 + $0x8] sm:$0xff]
        %v343 = vld [vmem:[%s290 + $0x10] sm:$0xff]
        %v344 = vld [vmem:[%s290 + $0x18] sm:$0xff]
        %v345 = vld [vmem:[%s290 + $0x20] sm:$0xff]
        %v346 = vld [vmem:[%s290 + $0x28] sm:$0xff]
        %v347 = vld [vmem:[%s290 + $0x30] sm:$0xff]
        %v348 = vld [vmem:[%s290 + $0x38] sm:$0xff]
        %v349 = vld [vmem:[%s290 + $0x40] sm:$0xff]
        %v350 = vld [vmem:[%s290 + $0x48] sm:$0xff]
        %v351 = vld [vmem:[%s290 + $0x50] sm:$0xff]
        %v352 = vld [vmem:[%s290 + $0x58] sm:$0xff]
        %v353 = vld [vmem:[%s290 + $0x60] sm:$0xff]
        %v354 = vld [vmem:[%s290 + $0x68] sm:$0xff]
        %v355 = vld [vmem:[%s290 + $0x70] sm:$0xff]
        %v356 = vld [vmem:[%s290 + $0x78] sm:$0xff]
        %v357 = vlaneseq
        %v358 = vshrl.u32 %v357, 7
        %v359 = vadd.s32 %v358, 8
        %v360 = vadd.s32 %v358, 16
        %v361 = vadd.s32 %v358, 24
        %v362 = vadd.s32 %v358, 32
        %v363 = vadd.s32 %v358, 40
        %v364 = vadd.s32 %v358, 48
        %v365 = vadd.s32 %v358, 56
        %v366 = vadd.s32 %v358, 64
        %v367 = vadd.s32 %v358, 72
        %v368 = vadd.s32 %v358, 80
        %v369 = vadd.s32 %v358, 88
        %v370 = vadd.s32 %v358, 96
        %v371 = vadd.s32 %v358, 104
        %v372 = vadd.s32 %v358, 112
        %v373 = vadd.s32 %v358, 120
        %v374 = vlaneseq
        %v375 = vand.u32 %v374, 127
        %v376 = vrot.slane %v341, 7
        %v377 = vrot.slane %v342, 7
        %v378 = vrot.slane %v343, 7
        %v379 = vrot.slane %v344, 7
        %v380 = vrot.slane %v345, 7
        %v381 = vrot.slane %v346, 7
        %v382 = vrot.slane %v347, 7
        %v383 = vrot.slane %v348, 7
        %v384 = vrot.slane %v349, 7
        %v385 = vrot.slane %v350, 7
        %v386 = vrot.slane %v351, 7
        %v387 = vrot.slane %v352, 7
        %v388 = vrot.slane %v353, 7
        %v389 = vrot.slane %v354, 7
        %v390 = vrot.slane %v355, 7
        %v391 = vrot.slane %v356, 7
        %vm392 = vcmp.lt.s32.totalorder %v358, 1
        %v393 = vsel %vm392, %v390, %v391
        %v394 = vsel %vm392, %v389, %v390
        %v395 = vsel %vm392, %v388, %v389
        %v396 = vsel %vm392, %v387, %v388
        %v397 = vsel %vm392, %v386, %v387
        %v398 = vsel %vm392, %v385, %v386
        %v399 = vsel %vm392, %v384, %v385
        %v400 = vsel %vm392, %v383, %v384
        %v401 = vsel %vm392, %v382, %v383
        %v402 = vsel %vm392, %v381, %v382
        %v403 = vsel %vm392, %v380, %v381
        %v404 = vsel %vm392, %v379, %v380
        %v405 = vsel %vm392, %v378, %v379
        %v406 = vsel %vm392, %v377, %v378
        %v407 = vsel %vm392, %v376, %v377
        %v408 = vsel %vm392, %v391, %v376
        %v409 = vrot.slane %v341, 1
        %v410 = vrot.slane %v342, 1
        %v411 = vrot.slane %v343, 1
        %v412 = vrot.slane %v344, 1
        %v413 = vrot.slane %v345, 1
        %v414 = vrot.slane %v346, 1
        %v415 = vrot.slane %v347, 1
        %v416 = vrot.slane %v348, 1
        %v417 = vrot.slane %v349, 1
        %v418 = vrot.slane %v350, 1
        %v419 = vrot.slane %v351, 1
        %v420 = vrot.slane %v352, 1
        %v421 = vrot.slane %v353, 1
        %v422 = vrot.slane %v354, 1
        %v423 = vrot.slane %v355, 1
        %v424 = vrot.slane %v356, 1
        %vm425 = vcmp.lt.s32.totalorder %v358, 7
        %v426 = vsel %vm425, %v423, %v424
        %v427 = vsel %vm425, %v422, %v423
        %v428 = vsel %vm425, %v421, %v422
        %v429 = vsel %vm425, %v420, %v421
        %v430 = vsel %vm425, %v419, %v420
        %v431 = vsel %vm425, %v418, %v419
        %v432 = vsel %vm425, %v417, %v418
        %v433 = vsel %vm425, %v416, %v417
        %v434 = vsel %vm425, %v415, %v416
        %v435 = vsel %vm425, %v414, %v415
        %v436 = vsel %vm425, %v413, %v414
        %v437 = vsel %vm425, %v412, %v413
        %v438 = vsel %vm425, %v411, %v412
        %v439 = vsel %vm425, %v410, %v411
        %v440 = vsel %vm425, %v409, %v410
        %v441 = vsel %vm425, %v424, %v409
        %v442 = vmul.f32 %v341, 2.0
        %v443 = vmul.f32 %v342, 2.0
        %v444 = vmul.f32 %v343, 2.0
        %v445 = vmul.f32 %v344, 2.0
        %v446 = vmul.f32 %v345, 2.0
        %v447 = vmul.f32 %v346, 2.0
        %v448 = vmul.f32 %v347, 2.0
        %v449 = vmul.f32 %v348, 2.0
        %v450 = vmul.f32 %v349, 2.0
        %v451 = vmul.f32 %v350, 2.0
        %v452 = vmul.f32 %v351, 2.0
        %v453 = vmul.f32 %v352, 2.0
        %v454 = vmul.f32 %v353, 2.0
        %v455 = vmul.f32 %v354, 2.0
        %v456 = vmul.f32 %v355, 2.0
        %v457 = vmul.f32 %v356, 2.0
        %v458 = vadd.f32 %v408, %v440
        %v459 = vadd.f32 %v407, %v439
        %v460 = vadd.f32 %v406, %v438
        %v461 = vadd.f32 %v405, %v437
        %v462 = vadd.f32 %v404, %v436
        %v463 = vadd.f32 %v403, %v435
        %v464 = vadd.f32 %v402, %v434
        %v465 = vadd.f32 %v401, %v433
        %v466 = vadd.f32 %v400, %v432
        %v467 = vadd.f32 %v399, %v431
        %v468 = vadd.f32 %v398, %v430
        %v469 = vadd.f32 %v397, %v429
        %v470 = vadd.f32 %v396, %v428
        %v471 = vadd.f32 %v395, %v427
        %v472 = vadd.f32 %v394, %v426
        %v473 = vadd.f32 %v393, %v441
        %v474 = vmul.f32 %v458, -1.0
        %v475 = vmul.f32 %v459, -1.0
        %v476 = vmul.f32 %v460, -1.0
        %v477 = vmul.f32 %v461, -1.0
        %v478 = vmul.f32 %v462, -1.0
        %v479 = vmul.f32 %v463, -1.0
        %v480 = vmul.f32 %v464, -1.0
        %v481 = vmul.f32 %v465, -1.0
        %v482 = vmul.f32 %v466, -1.0
        %v483 = vmul.f32 %v467, -1.0
        %v484 = vmul.f32 %v468, -1.0
        %v485 = vmul.f32 %v469, -1.0
        %v486 = vmul.f32 %v470, -1.0
        %v487 = vmul.f32 %v471, -1.0
        %v488 = vmul.f32 %v472, -1.0
        %v489 = vmul.f32 %v473, -1.0
        %v490 = vadd.f32 %v442, %v474
        %v491 = vadd.f32 %v443, %v475
        %v492 = vadd.f32 %v444, %v476
        %v493 = vadd.f32 %v445, %v477
        %v494 = vadd.f32 %v446, %v478
        %v495 = vadd.f32 %v447, %v479
        %v496 = vadd.f32 %v448, %v480
        %v497 = vadd.f32 %v449, %v481
        %v498 = vadd.f32 %v450, %v482
        %v499 = vadd.f32 %v451, %v483
        %v500 = vadd.f32 %v452, %v484
        %v501 = vadd.f32 %v453, %v485
        %v502 = vadd.f32 %v454, %v486
        %v503 = vadd.f32 %v455, %v487
        %v504 = vadd.f32 %v456, %v488
        %v505 = vadd.f32 %v457, %v489
        %506 = vrot.lane.b32.xlu0 %v490, 1
        %v507 = vpop.permute.xlu0 %506
        %508 = vrot.lane.b32.xlu0 %v491, 1
        %v509 = vpop.permute.xlu0 %508
        %510 = vrot.lane.b32.xlu0 %v492, 1
        %v511 = vpop.permute.xlu0 %510
        %512 = vrot.lane.b32.xlu0 %v493, 1
        %v513 = vpop.permute.xlu0 %512
        %514 = vrot.lane.b32.xlu0 %v494, 1
        %v515 = vpop.permute.xlu0 %514
        %516 = vrot.lane.b32.xlu0 %v495, 1
        %v517 = vpop.permute.xlu0 %516
        %518 = vrot.lane.b32.xlu0 %v496, 1
        %v519 = vpop.permute.xlu0 %518
        %520 = vrot.lane.b32.xlu0 %v497, 1
        %v521 = vpop.permute.xlu0 %520
        %522 = vrot.lane.b32.xlu0 %v498, 1
        %v523 = vpop.permute.xlu0 %522
        %524 = vrot.lane.b32.xlu0 %v499, 1
        %v525 = vpop.permute.xlu0 %524
        %526 = vrot.lane.b32.xlu0 %v500, 1
        %v527 = vpop.permute.xlu0 %526
        %528 = vrot.lane.b32.xlu0 %v501, 1
        %v529 = vpop.permute.xlu0 %528
        %530 = vrot.lane.b32.xlu0 %v502, 1
        %v531 = vpop.permute.xlu0 %530
        %532 = vrot.lane.b32.xlu0 %v503, 1
        %v533 = vpop.permute.xlu0 %532
        %534 = vrot.lane.b32.xlu0 %v504, 1
        %v535 = vpop.permute.xlu0 %534
        %536 = vrot.lane.b32.xlu0 %v505, 1
        %v537 = vpop.permute.xlu0 %536
        %538 = vrot.lane.b32.xlu0 %v490, 127
        %v539 = vpop.permute.xlu0 %538
        %540 = vrot.lane.b32.xlu0 %v491, 127
        %v541 = vpop.permute.xlu0 %540
        %542 = vrot.lane.b32.xlu0 %v492, 127
        %v543 = vpop.permute.xlu0 %542
        %544 = vrot.lane.b32.xlu0 %v493, 127
        %v545 = vpop.permute.xlu0 %544
        %546 = vrot.lane.b32.xlu0 %v494, 127
        %v547 = vpop.permute.xlu0 %546
        %548 = vrot.lane.b32.xlu0 %v495, 127
        %v549 = vpop.permute.xlu0 %548
        %550 = vrot.lane.b32.xlu0 %v496, 127
        %v551 = vpop.permute.xlu0 %550
        %552 = vrot.lane.b32.xlu0 %v497, 127
        %v553 = vpop.permute.xlu0 %552
        %554 = vrot.lane.b32.xlu0 %v498, 127
        %v555 = vpop.permute.xlu0 %554
        %556 = vrot.lane.b32.xlu0 %v499, 127
        %v557 = vpop.permute.xlu0 %556
        %558 = vrot.lane.b32.xlu0 %v500, 127
        %v559 = vpop.permute.xlu0 %558
        %560 = vrot.lane.b32.xlu0 %v501, 127
        %v561 = vpop.permute.xlu0 %560
        %562 = vrot.lane.b32.xlu0 %v502, 127
        %v563 = vpop.permute.xlu0 %562
        %564 = vrot.lane.b32.xlu0 %v503, 127
        %v565 = vpop.permute.xlu0 %564
        %566 = vrot.lane.b32.xlu0 %v504, 127
        %v567 = vpop.permute.xlu0 %566
        %568 = vrot.lane.b32.xlu0 %v505, 127
        %v569 = vpop.permute.xlu0 %568
        %v570 = vmul.f32 %v490, 2.0
        %v571 = vmul.f32 %v491, 2.0
        %v572 = vmul.f32 %v492, 2.0
        %v573 = vmul.f32 %v493, 2.0
        %v574 = vmul.f32 %v494, 2.0
        %v575 = vmul.f32 %v495, 2.0
        %v576 = vmul.f32 %v496, 2.0
        %v577 = vmul.f32 %v497, 2.0
        %v578 = vmul.f32 %v498, 2.0
        %v579 = vmul.f32 %v499, 2.0
        %v580 = vmul.f32 %v500, 2.0
        %v581 = vmul.f32 %v501, 2.0
        %v582 = vmul.f32 %v502, 2.0
        %v583 = vmul.f32 %v503, 2.0
        %v584 = vmul.f32 %v504, 2.0
        %v585 = vmul.f32 %v505, 2.0
        %v586 = vadd.f32 %v507, %v539
        %v587 = vadd.f32 %v509, %v541
        %v588 = vadd.f32 %v511, %v543
        %v589 = vadd.f32 %v513, %v545
        %v590 = vadd.f32 %v515, %v547
        %v591 = vadd.f32 %v517, %v549
        %v592 = vadd.f32 %v519, %v551
        %v593 = vadd.f32 %v521, %v553
        %v594 = vadd.f32 %v523, %v555
        %v595 = vadd.f32 %v525, %v557
        %v596 = vadd.f32 %v527, %v559
        %v597 = vadd.f32 %v529, %v561
        %v598 = vadd.f32 %v531, %v563
        %v599 = vadd.f32 %v533, %v565
        %v600 = vadd.f32 %v535, %v567
        %v601 = vadd.f32 %v537, %v569
        %v602 = vmul.f32 %v586, -1.0
        %v603 = vmul.f32 %v587, -1.0
        %v604 = vmul.f32 %v588, -1.0
        %v605 = vmul.f32 %v589, -1.0
        %v606 = vmul.f32 %v590, -1.0
        %v607 = vmul.f32 %v591, -1.0
        %v608 = vmul.f32 %v592, -1.0
        %v609 = vmul.f32 %v593, -1.0
        %v610 = vmul.f32 %v594, -1.0
        %v611 = vmul.f32 %v595, -1.0
        %v612 = vmul.f32 %v596, -1.0
        %v613 = vmul.f32 %v597, -1.0
        %v614 = vmul.f32 %v598, -1.0
        %v615 = vmul.f32 %v599, -1.0
        %v616 = vmul.f32 %v600, -1.0
        %v617 = vmul.f32 %v601, -1.0
        %v618 = vadd.f32 %v570, %v602
        %v619 = vadd.f32 %v571, %v603
        %v620 = vadd.f32 %v572, %v604
        %v621 = vadd.f32 %v573, %v605
        %v622 = vadd.f32 %v574, %v606
        %v623 = vadd.f32 %v575, %v607
        %v624 = vadd.f32 %v576, %v608
        %v625 = vadd.f32 %v577, %v609
        %v626 = vadd.f32 %v578, %v610
        %v627 = vadd.f32 %v579, %v611
        %v628 = vadd.f32 %v580, %v612
        %v629 = vadd.f32 %v581, %v613
        %v630 = vadd.f32 %v582, %v614
        %v631 = vadd.f32 %v583, %v615
        %v632 = vadd.f32 %v584, %v616
        %v633 = vadd.f32 %v585, %v617
        %v634 = vand.u32 2147483647, %v618
        %v635 = vand.u32 2147483647, %v619
        %v636 = vand.u32 2147483647, %v620
        %v637 = vand.u32 2147483647, %v621
        %v638 = vand.u32 2147483647, %v622
        %v639 = vand.u32 2147483647, %v623
        %v640 = vand.u32 2147483647, %v624
        %v641 = vand.u32 2147483647, %v625
        %v642 = vand.u32 2147483647, %v626
        %v643 = vand.u32 2147483647, %v627
        %v644 = vand.u32 2147483647, %v628
        %v645 = vand.u32 2147483647, %v629
        %v646 = vand.u32 2147483647, %v630
        %v647 = vand.u32 2147483647, %v631
        %v648 = vand.u32 2147483647, %v632
        %v649 = vand.u32 2147483647, %v633
        %vm650 = vcmp.lt.s32.totalorder %v358, 16
        %vm651 = vcmp.lt.s32.totalorder %v359, 16
        %vm652 = vcmp.lt.s32.totalorder %v360, 16
        %vm653 = vcmp.lt.s32.totalorder %v361, 16
        %vm654 = vcmp.lt.s32.totalorder %v362, 16
        %vm655 = vcmp.lt.s32.totalorder %v363, 16
        %vm656 = vcmp.lt.s32.totalorder %v364, 16
        %vm657 = vcmp.lt.s32.totalorder %v365, 16
        %vm658 = vcmp.lt.s32.totalorder %v366, 16
        %vm659 = vcmp.lt.s32.totalorder %v367, 16
        %vm660 = vcmp.lt.s32.totalorder %v368, 16
        %vm661 = vcmp.lt.s32.totalorder %v369, 16
        %vm662 = vcmp.lt.s32.totalorder %v370, 16
        %vm663 = vcmp.lt.s32.totalorder %v371, 16
        %vm664 = vcmp.lt.s32.totalorder %v372, 16
        %vm665 = vcmp.lt.s32.totalorder %v373, 16
        %vm666 = vcmp.lt.s32.totalorder %v375, 16
        %v667 = vsel %vm650, 1, 0
        %v668 = vsel %vm651, 1, 0
        %v669 = vsel %vm652, 1, 0
        %v670 = vsel %vm653, 1, 0
        %v671 = vsel %vm654, 1, 0
        %v672 = vsel %vm655, 1, 0
        %v673 = vsel %vm656, 1, 0
        %v674 = vsel %vm657, 1, 0
        %v675 = vsel %vm658, 1, 0
        %v676 = vsel %vm659, 1, 0
        %v677 = vsel %vm660, 1, 0
        %v678 = vsel %vm661, 1, 0
        %v679 = vsel %vm662, 1, 0
        %v680 = vsel %vm663, 1, 0
        %v681 = vsel %vm664, 1, 0
        %v682 = vsel %vm665, 1, 0
        %vm683 = vcmp.eq.s32.totalorder %v667, 1
        %vm684 = vcmp.eq.s32.totalorder %v668, 1
        %vm685 = vcmp.eq.s32.totalorder %v669, 1
        %vm686 = vcmp.eq.s32.totalorder %v670, 1
        %vm687 = vcmp.eq.s32.totalorder %v671, 1
        %vm688 = vcmp.eq.s32.totalorder %v672, 1
        %vm689 = vcmp.eq.s32.totalorder %v673, 1
        %vm690 = vcmp.eq.s32.totalorder %v674, 1
        %vm691 = vcmp.eq.s32.totalorder %v675, 1
        %vm692 = vcmp.eq.s32.totalorder %v676, 1
        %vm693 = vcmp.eq.s32.totalorder %v677, 1
        %vm694 = vcmp.eq.s32.totalorder %v678, 1
        %vm695 = vcmp.eq.s32.totalorder %v679, 1
        %vm696 = vcmp.eq.s32.totalorder %v680, 1
        %vm697 = vcmp.eq.s32.totalorder %v681, 1
        %vm698 = vcmp.eq.s32.totalorder %v682, 1
        %v699 = vsel %vm666, 1, 0
        %vm700 = vcmp.eq.s32.totalorder %v699, 1
        %vm701 = vmand %vm683, %vm700
        %vm702 = vmand %vm684, %vm700
        %vm703 = vmand %vm685, %vm700
        %vm704 = vmand %vm686, %vm700
        %vm705 = vmand %vm687, %vm700
        %vm706 = vmand %vm688, %vm700
        %vm707 = vmand %vm689, %vm700
        %vm708 = vmand %vm690, %vm700
        %vm709 = vmand %vm691, %vm700
        %vm710 = vmand %vm692, %vm700
        %vm711 = vmand %vm693, %vm700
        %vm712 = vmand %vm694, %vm700
        %vm713 = vmand %vm695, %vm700
        %vm714 = vmand %vm696, %vm700
        %vm715 = vmand %vm697, %vm700
        %vm716 = vmand %vm698, %vm700
        %v717 = vsel %vm701, %v634, 0.0
        %v718 = vsel %vm702, %v635, 0.0
        %v719 = vsel %vm703, %v636, 0.0
        %v720 = vsel %vm704, %v637, 0.0
        %v721 = vsel %vm705, %v638, 0.0
        %v722 = vsel %vm706, %v639, 0.0
        %v723 = vsel %vm707, %v640, 0.0
        %v724 = vsel %vm708, %v641, 0.0
        %v725 = vsel %vm709, %v642, 0.0
        %v726 = vsel %vm710, %v643, 0.0
        %v727 = vsel %vm711, %v644, 0.0
        %v728 = vsel %vm712, %v645, 0.0
        %v729 = vsel %vm713, %v646, 0.0
        %v730 = vsel %vm714, %v647, 0.0
        %v731 = vsel %vm715, %v648, 0.0
        %v732 = vsel %vm716, %v649, 0.0
        %v733 = vrot.slane %v717, 7
        %v734 = vrot.slane %v718, 7
        %v735 = vrot.slane %v719, 7
        %v736 = vrot.slane %v720, 7
        %v737 = vrot.slane %v721, 7
        %v738 = vrot.slane %v722, 7
        %v739 = vrot.slane %v723, 7
        %v740 = vrot.slane %v724, 7
        %v741 = vrot.slane %v725, 7
        %v742 = vrot.slane %v726, 7
        %v743 = vrot.slane %v727, 7
        %v744 = vrot.slane %v728, 7
        %v745 = vrot.slane %v729, 7
        %v746 = vrot.slane %v730, 7
        %v747 = vrot.slane %v731, 7
        %v748 = vrot.slane %v732, 7
        %v749 = vsel %vm392, %v747, %v748
        %v750 = vsel %vm392, %v746, %v747
        %v751 = vsel %vm392, %v745, %v746
        %v752 = vsel %vm392, %v744, %v745
        %v753 = vsel %vm392, %v743, %v744
        %v754 = vsel %vm392, %v742, %v743
        %v755 = vsel %vm392, %v741, %v742
        %v756 = vsel %vm392, %v740, %v741
        %v757 = vsel %vm392, %v739, %v740
        %v758 = vsel %vm392, %v738, %v739
        %v759 = vsel %vm392, %v737, %v738
        %v760 = vsel %vm392, %v736, %v737
        %v761 = vsel %vm392, %v735, %v736
        %v762 = vsel %vm392, %v734, %v735
        %v763 = vsel %vm392, %v733, %v734
        %v764 = vsel %vm392, %v748, %v733
        %v765 = vrot.slane %v717, 1
        %v766 = vrot.slane %v718, 1
        %v767 = vrot.slane %v719, 1
        %v768 = vrot.slane %v720, 1
        %v769 = vrot.slane %v721, 1
        %v770 = vrot.slane %v722, 1
        %v771 = vrot.slane %v723, 1
        %v772 = vrot.slane %v724, 1
        %v773 = vrot.slane %v725, 1
        %v774 = vrot.slane %v726, 1
        %v775 = vrot.slane %v727, 1
        %v776 = vrot.slane %v728, 1
        %v777 = vrot.slane %v729, 1
        %v778 = vrot.slane %v730, 1
        %v779 = vrot.slane %v731, 1
        %v780 = vrot.slane %v732, 1
        %v781 = vsel %vm425, %v779, %v780
        %v782 = vsel %vm425, %v778, %v779
        %v783 = vsel %vm425, %v777, %v778
        %v784 = vsel %vm425, %v776, %v777
        %v785 = vsel %vm425, %v775, %v776
        %v786 = vsel %vm425, %v774, %v775
        %v787 = vsel %vm425, %v773, %v774
        %v788 = vsel %vm425, %v772, %v773
        %v789 = vsel %vm425, %v771, %v772
        %v790 = vsel %vm425, %v770, %v771
        %v791 = vsel %vm425, %v769, %v770
        %v792 = vsel %vm425, %v768, %v769
        %v793 = vsel %vm425, %v767, %v768
        %v794 = vsel %vm425, %v766, %v767
        %v795 = vsel %vm425, %v765, %v766
        %v796 = vsel %vm425, %v780, %v765
        %v797 = vadd.f32 %v764, %v795
        %v798 = vadd.f32 %v763, %v794
        %v799 = vadd.f32 %v762, %v793
        %v800 = vadd.f32 %v761, %v792
        %v801 = vadd.f32 %v760, %v791
        %v802 = vadd.f32 %v759, %v790
        %v803 = vadd.f32 %v758, %v789
        %v804 = vadd.f32 %v757, %v788
        %v805 = vadd.f32 %v756, %v787
        %v806 = vadd.f32 %v755, %v786
        %v807 = vadd.f32 %v754, %v785
        %v808 = vadd.f32 %v753, %v784
        %v809 = vadd.f32 %v752, %v783
        %v810 = vadd.f32 %v751, %v782
        %v811 = vadd.f32 %v750, %v781
        %v812 = vadd.f32 %v749, %v796
        %v813 = vadd.f32 %v717, %v797
        %v814 = vadd.f32 %v718, %v798
        %v815 = vadd.f32 %v719, %v799
        %v816 = vadd.f32 %v720, %v800
        %v817 = vadd.f32 %v721, %v801
        %v818 = vadd.f32 %v722, %v802
        %v819 = vadd.f32 %v723, %v803
        %v820 = vadd.f32 %v724, %v804
        %v821 = vadd.f32 %v725, %v805
        %v822 = vadd.f32 %v726, %v806
        %v823 = vadd.f32 %v727, %v807
        %v824 = vadd.f32 %v728, %v808
        %v825 = vadd.f32 %v729, %v809
        %v826 = vadd.f32 %v730, %v810
        %v827 = vadd.f32 %v731, %v811
        %v828 = vadd.f32 %v732, %v812
        %829 = vrot.lane.b32.xlu0 %v813, 1
        %v830 = vpop.permute.xlu0 %829
        %831 = vrot.lane.b32.xlu0 %v814, 1
        %v832 = vpop.permute.xlu0 %831
        %833 = vrot.lane.b32.xlu0 %v815, 1
        %v834 = vpop.permute.xlu0 %833
        %835 = vrot.lane.b32.xlu0 %v816, 1
        %v836 = vpop.permute.xlu0 %835
        %837 = vrot.lane.b32.xlu0 %v817, 1
        %v838 = vpop.permute.xlu0 %837
        %839 = vrot.lane.b32.xlu0 %v818, 1
        %v840 = vpop.permute.xlu0 %839
        %841 = vrot.lane.b32.xlu0 %v819, 1
        %v842 = vpop.permute.xlu0 %841
        %843 = vrot.lane.b32.xlu0 %v820, 1
        %v844 = vpop.permute.xlu0 %843
        %845 = vrot.lane.b32.xlu0 %v821, 1
        %v846 = vpop.permute.xlu0 %845
        %847 = vrot.lane.b32.xlu0 %v822, 1
        %v848 = vpop.permute.xlu0 %847
        %849 = vrot.lane.b32.xlu0 %v823, 1
        %v850 = vpop.permute.xlu0 %849
        %851 = vrot.lane.b32.xlu0 %v824, 1
        %v852 = vpop.permute.xlu0 %851
        %853 = vrot.lane.b32.xlu0 %v825, 1
        %v854 = vpop.permute.xlu0 %853
        %855 = vrot.lane.b32.xlu0 %v826, 1
        %v856 = vpop.permute.xlu0 %855
        %857 = vrot.lane.b32.xlu0 %v827, 1
        %v858 = vpop.permute.xlu0 %857
        %859 = vrot.lane.b32.xlu0 %v828, 1
        %v860 = vpop.permute.xlu0 %859
        %861 = vrot.lane.b32.xlu0 %v813, 127
        %v862 = vpop.permute.xlu0 %861
        %863 = vrot.lane.b32.xlu0 %v814, 127
        %v864 = vpop.permute.xlu0 %863
        %865 = vrot.lane.b32.xlu0 %v815, 127
        %v866 = vpop.permute.xlu0 %865
        %867 = vrot.lane.b32.xlu0 %v816, 127
        %v868 = vpop.permute.xlu0 %867
        %869 = vrot.lane.b32.xlu0 %v817, 127
        %v870 = vpop.permute.xlu0 %869
        %871 = vrot.lane.b32.xlu0 %v818, 127
        %v872 = vpop.permute.xlu0 %871
        %873 = vrot.lane.b32.xlu0 %v819, 127
        %v874 = vpop.permute.xlu0 %873
        %875 = vrot.lane.b32.xlu0 %v820, 127
        %v876 = vpop.permute.xlu0 %875
        %877 = vrot.lane.b32.xlu0 %v821, 127
        %v878 = vpop.permute.xlu0 %877
        %879 = vrot.lane.b32.xlu0 %v822, 127
        %v880 = vpop.permute.xlu0 %879
        %881 = vrot.lane.b32.xlu0 %v823, 127
        %v882 = vpop.permute.xlu0 %881
        %883 = vrot.lane.b32.xlu0 %v824, 127
        %v884 = vpop.permute.xlu0 %883
        %885 = vrot.lane.b32.xlu0 %v825, 127
        %v886 = vpop.permute.xlu0 %885
        %887 = vrot.lane.b32.xlu0 %v826, 127
        %v888 = vpop.permute.xlu0 %887
        %889 = vrot.lane.b32.xlu0 %v827, 127
        %v890 = vpop.permute.xlu0 %889
        %891 = vrot.lane.b32.xlu0 %v828, 127
        %v892 = vpop.permute.xlu0 %891
        %v893 = vadd.f32 %v830, %v862
        %v894 = vadd.f32 %v832, %v864
        %v895 = vadd.f32 %v834, %v866
        %v896 = vadd.f32 %v836, %v868
        %v897 = vadd.f32 %v838, %v870
        %v898 = vadd.f32 %v840, %v872
        %v899 = vadd.f32 %v842, %v874
        %v900 = vadd.f32 %v844, %v876
        %v901 = vadd.f32 %v846, %v878
        %v902 = vadd.f32 %v848, %v880
        %v903 = vadd.f32 %v850, %v882
        %v904 = vadd.f32 %v852, %v884
        %v905 = vadd.f32 %v854, %v886
        %v906 = vadd.f32 %v856, %v888
        %v907 = vadd.f32 %v858, %v890
        %v908 = vadd.f32 %v860, %v892
        %v909 = vadd.f32 %v813, %v893
        %v910 = vadd.f32 %v814, %v894
        %v911 = vadd.f32 %v815, %v895
        %v912 = vadd.f32 %v816, %v896
        %v913 = vadd.f32 %v817, %v897
        %v914 = vadd.f32 %v818, %v898
        %v915 = vadd.f32 %v819, %v899
        %v916 = vadd.f32 %v820, %v900
        %v917 = vadd.f32 %v821, %v901
        %v918 = vadd.f32 %v822, %v902
        %v919 = vadd.f32 %v823, %v903
        %v920 = vadd.f32 %v824, %v904
        %v921 = vadd.f32 %v825, %v905
        %v922 = vadd.f32 %v826, %v906
        %v923 = vadd.f32 %v827, %v907
        %v924 = vadd.f32 %v828, %v908
        %v925 = vmul.f32 %v909, 0.11111111
        %v926 = vmul.f32 %v910, 0.11111111
        %v927 = vmul.f32 %v911, 0.11111111
        %v928 = vmul.f32 %v912, 0.11111111
        %v929 = vmul.f32 %v913, 0.11111111
        %v930 = vmul.f32 %v914, 0.11111111
        %v931 = vmul.f32 %v915, 0.11111111
        %v932 = vmul.f32 %v916, 0.11111111
        %v933 = vmul.f32 %v917, 0.11111111
        %v934 = vmul.f32 %v918, 0.11111111
        %v935 = vmul.f32 %v919, 0.11111111
        %v936 = vmul.f32 %v920, 0.11111111
        %v937 = vmul.f32 %v921, 0.11111111
        %v938 = vmul.f32 %v922, 0.11111111
        %v939 = vmul.f32 %v923, 0.11111111
        %v940 = vmul.f32 %v924, 0.11111111
        %v941 = vadd.f32 %v925, 1e-10
        %v942 = vadd.f32 %v926, 1e-10
        %v943 = vadd.f32 %v927, 1e-10
        %v944 = vadd.f32 %v928, 1e-10
        %v945 = vadd.f32 %v929, 1e-10
        %v946 = vadd.f32 %v930, 1e-10
        %v947 = vadd.f32 %v931, 1e-10
        %v948 = vadd.f32 %v932, 1e-10
        %v949 = vadd.f32 %v933, 1e-10
        %v950 = vadd.f32 %v934, 1e-10
        %v951 = vadd.f32 %v935, 1e-10
        %v952 = vadd.f32 %v936, 1e-10
        %v953 = vadd.f32 %v937, 1e-10
        %v954 = vadd.f32 %v938, 1e-10
        %v955 = vadd.f32 %v939, 1e-10
        %v956 = vadd.f32 %v940, 1e-10
        %v957 = vrcp.pop %v941
        %v958 = vrcp.pop %v942
        %v959 = vrcp.pop %v943
        %v960 = vrcp.pop %v944
        %v961 = vrcp.pop %v945
        %v962 = vrcp.pop %v946
        %v963 = vrcp.pop %v947
        %v964 = vrcp.pop %v948
        %v965 = vrcp.pop %v949
        %v966 = vrcp.pop %v950
        %v967 = vrcp.pop %v951
        %v968 = vrcp.pop %v952
        %v969 = vrcp.pop %v953
        %v970 = vrcp.pop %v954
        %v971 = vrcp.pop %v955
        %v972 = vrcp.pop %v956
        %v973 = vmin.f32 %v957, 1e+10
        %v974 = vmin.f32 %v958, 1e+10
        %v975 = vmin.f32 %v959, 1e+10
        %v976 = vmin.f32 %v960, 1e+10
        %v977 = vmin.f32 %v961, 1e+10
        %v978 = vmin.f32 %v962, 1e+10
        %v979 = vmin.f32 %v963, 1e+10
        %v980 = vmin.f32 %v964, 1e+10
        %v981 = vmin.f32 %v965, 1e+10
        %v982 = vmin.f32 %v966, 1e+10
        %v983 = vmin.f32 %v967, 1e+10
        %v984 = vmin.f32 %v968, 1e+10
        %v985 = vmin.f32 %v969, 1e+10
        %v986 = vmin.f32 %v970, 1e+10
        %v987 = vmin.f32 %v971, 1e+10
        %v988 = vmin.f32 %v972, 1e+10
        %v989 = vld [vmem:[#allocation9] sm:$0xff]
        %v990 = vld [vmem:[#allocation9 + $0x8] sm:$0xff]
        %v991 = vld [vmem:[#allocation9 + $0x10] sm:$0xff]
        %v992 = vld [vmem:[#allocation9 + $0x18] sm:$0xff]
        %v993 = vld [vmem:[#allocation9 + $0x20] sm:$0xff]
        %v994 = vld [vmem:[#allocation9 + $0x28] sm:$0xff]
        %v995 = vld [vmem:[#allocation9 + $0x30] sm:$0xff]
        %v996 = vld [vmem:[#allocation9 + $0x38] sm:$0xff]
        %v997 = vld [vmem:[#allocation9 + $0x40] sm:$0xff]
        %v998 = vld [vmem:[#allocation9 + $0x48] sm:$0xff]
        %v999 = vld [vmem:[#allocation9 + $0x50] sm:$0xff]
        %v1000 = vld [vmem:[#allocation9 + $0x58] sm:$0xff]
        %v1001 = vld [vmem:[#allocation9 + $0x60] sm:$0xff]
        %v1002 = vld [vmem:[#allocation9 + $0x68] sm:$0xff]
        %v1003 = vld [vmem:[#allocation9 + $0x70] sm:$0xff]
        %v1004 = vld [vmem:[#allocation9 + $0x78] sm:$0xff]
        %1005 = vmatprep.subr.mxu0 0.0
        %1006 = vmatpush1.msra.mxu0 %v973
        %1007 = vmatprep.subr.mxu0 0.0
        %1008 = vmatpush1.msra.mxu0 %v974
        %1009 = vmatprep.subr.mxu0 0.0
        %1010 = vmatpush1.msra.mxu0 %v975
        %1011 = vmatprep.subr.mxu0 0.0
        %1012 = vmatpush1.msra.mxu0 %v976
        %1013 = vmatprep.subr.mxu0 0.0
        %1014 = vmatpush1.msra.mxu0 %v977
        %1015 = vmatprep.subr.mxu0 0.0
        %1016 = vmatpush1.msra.mxu0 %v978
        %1017 = vmatprep.subr.mxu0 0.0
        %1018 = vmatpush1.msra.mxu0 %v979
        %1019 = vmatprep.subr.mxu0 0.0
        %1020 = vmatpush1.msra.mxu0 %v980
        %1021 = vmatprep.subr.mxu0 0.0
        %1022 = vmatpush1.msra.mxu0 %v981
        %1023 = vmatprep.subr.mxu0 0.0
        %1024 = vmatpush1.msra.mxu0 %v982
        %1025 = vmatprep.subr.mxu0 0.0
        %1026 = vmatpush1.msra.mxu0 %v983
        %1027 = vmatprep.subr.mxu0 0.0
        %1028 = vmatpush1.msra.mxu0 %v984
        %1029 = vmatprep.subr.mxu0 0.0
        %1030 = vmatpush1.msra.mxu0 %v985
        %1031 = vmatprep.subr.mxu0 0.0
        %1032 = vmatpush1.msra.mxu0 %v986
        %1033 = vmatprep.subr.mxu0 0.0
        %1034 = vmatpush1.msra.mxu0 %v987
        %1035 = vmatprep.subr.mxu0 0.0
        %1036 = vmatpush1.msra.mxu0 %v988
        %1037 = vmatprep.subr.mxu0 0.0
        %1038 = vmatpush1.msra.mxu0 0.0
        %1039 = vmatprep.subr.mxu0 0.0
        %1040 = vmatpush1.msra.mxu0 0.0
        %1041 = vmatprep.subr.mxu0 0.0
        %1042 = vmatpush1.msra.mxu0 0.0
        %1043 = vmatprep.subr.mxu0 0.0
        %1044 = vmatpush1.msra.mxu0 0.0
        %1045 = vmatprep.subr.mxu0 0.0
        %1046 = vmatpush1.msra.mxu0 0.0
        %1047 = vmatprep.subr.mxu0 0.0
        %1048 = vmatpush1.msra.mxu0 0.0
        %1049 = vmatprep.subr.mxu0 0.0
        %1050 = vmatpush1.msra.mxu0 0.0
        %1051 = vmatprep.subr.mxu0 0.0
        %1052 = vmatpush1.msra.mxu0 0.0
        %1053 = vmatprep.subr.mxu0 0.0
        %1054 = vmatpush1.msra.mxu0 0.0
        %1055 = vmatprep.subr.mxu0 0.0
        %1056 = vmatpush1.msra.mxu0 0.0
        %1057 = vmatprep.subr.mxu0 0.0
        %1058 = vmatpush1.msra.mxu0 0.0
        %1059 = vmatprep.subr.mxu0 0.0
        %1060 = vmatpush1.msra.mxu0 0.0
        %1061 = vmatprep.subr.mxu0 0.0
        %1062 = vmatpush1.msra.mxu0 0.0
        %1063 = vmatprep.subr.mxu0 0.0
        %1064 = vmatpush1.msra.mxu0 0.0
        %1065 = vmatprep.subr.mxu0 0.0
        %1066 = vmatpush1.msra.mxu0 0.0
        %1067 = vmatprep.subr.mxu0 0.0
        %1068 = vmatpush1.msra.mxu0 0.0
        %1069 = vmatprep.mubr.f32.mxu0 0.0
        %1070 = vmatmul.mubr.f32.gmra.mrb[0].mxu0 %v989
        %v1071 = vpop.f32.mrb[0].mxu0
        %v1072 = vadd.f32 0.0, %v1071
        %v1073 = vpop.f32.mrb[0].mxu0
        %1074 = vmatprep.mubr.f32.mxu0 0.0
        %1075 = vmatmul.mubr.f32.gmra.mrb[0].mxu0 %v990
        %v1076 = vpop.f32.mrb[0].mxu0
        %v1077 = vadd.f32 0.0, %v1076
        %v1078 = vpop.f32.mrb[0].mxu0
        %1079 = vmatprep.mubr.f32.mxu0 0.0
        %1080 = vmatmul.mubr.f32.gmra.mrb[0].mxu0 %v991
        %v1081 = vpop.f32.mrb[0].mxu0
        %v1082 = vadd.f32 0.0, %v1081
        %v1083 = vpop.f32.mrb[0].mxu0
        %1084 = vmatprep.mubr.f32.mxu0 0.0
        %1085 = vmatmul.mubr.f32.gmra.mrb[0].mxu0 %v992
        %v1086 = vpop.f32.mrb[0].mxu0
        %v1087 = vadd.f32 0.0, %v1086
        %v1088 = vpop.f32.mrb[0].mxu0
        %1089 = vmatprep.mubr.f32.mxu0 0.0
        %1090 = vmatmul.mubr.f32.gmra.mrb[0].mxu0 %v993
        %v1091 = vpop.f32.mrb[0].mxu0
        %v1092 = vadd.f32 0.0, %v1091
        %v1093 = vpop.f32.mrb[0].mxu0
        %1094 = vmatprep.mubr.f32.mxu0 0.0
        %1095 = vmatmul.mubr.f32.gmra.mrb[0].mxu0 %v994
        %v1096 = vpop.f32.mrb[0].mxu0
        %v1097 = vadd.f32 0.0, %v1096
        %v1098 = vpop.f32.mrb[0].mxu0
        %1099 = vmatprep.mubr.f32.mxu0 0.0
        %1100 = vmatmul.mubr.f32.gmra.mrb[0].mxu0 %v995
        %v1101 = vpop.f32.mrb[0].mxu0
        %v1102 = vadd.f32 0.0, %v1101
        %v1103 = vpop.f32.mrb[0].mxu0
        %1104 = vmatprep.mubr.f32.mxu0 0.0
        %1105 = vmatmul.mubr.f32.gmra.mrb[0].mxu0 %v996
        %v1106 = vpop.f32.mrb[0].mxu0
        %v1107 = vadd.f32 0.0, %v1106
        %v1108 = vpop.f32.mrb[0].mxu0
        %1109 = vmatprep.mubr.f32.mxu0 0.0
        %1110 = vmatmul.mubr.f32.gmra.mrb[0].mxu0 %v997
        %v1111 = vpop.f32.mrb[0].mxu0
        %v1112 = vadd.f32 0.0, %v1111
        %v1113 = vpop.f32.mrb[0].mxu0
        %1114 = vmatprep.mubr.f32.mxu0 0.0
        %1115 = vmatmul.mubr.f32.gmra.mrb[0].mxu0 %v998
        %v1116 = vpop.f32.mrb[0].mxu0
        %v1117 = vadd.f32 0.0, %v1116
        %v1118 = vpop.f32.mrb[0].mxu0
        %1119 = vmatprep.mubr.f32.mxu0 0.0
        %1120 = vmatmul.mubr.f32.gmra.mrb[0].mxu0 %v999
        %v1121 = vpop.f32.mrb[0].mxu0
        %v1122 = vadd.f32 0.0, %v1121
        %v1123 = vpop.f32.mrb[0].mxu0
        %1124 = vmatprep.mubr.f32.mxu0 0.0
        %1125 = vmatmul.mubr.f32.gmra.mrb[0].mxu0 %v1000
        %v1126 = vpop.f32.mrb[0].mxu0
        %v1127 = vadd.f32 0.0, %v1126
        %v1128 = vpop.f32.mrb[0].mxu0
        %1129 = vmatprep.mubr.f32.mxu0 0.0
        %1130 = vmatmul.mubr.f32.gmra.mrb[0].mxu0 %v1001
        %v1131 = vpop.f32.mrb[0].mxu0
        %v1132 = vadd.f32 0.0, %v1131
        %v1133 = vpop.f32.mrb[0].mxu0
        %1134 = vmatprep.mubr.f32.mxu0 0.0
        %1135 = vmatmul.mubr.f32.gmra.mrb[0].mxu0 %v1002
        %v1136 = vpop.f32.mrb[0].mxu0
        %v1137 = vadd.f32 0.0, %v1136
        %v1138 = vpop.f32.mrb[0].mxu0
        %1139 = vmatprep.mubr.f32.mxu0 0.0
        %1140 = vmatmul.mubr.f32.gmra.mrb[0].mxu0 %v1003
        %v1141 = vpop.f32.mrb[0].mxu0
        %v1142 = vadd.f32 0.0, %v1141
        %v1143 = vpop.f32.mrb[0].mxu0
        %1144 = vmatprep.mubr.f32.mxu0 0.0
        %1145 = vmatmul.mubr.f32.gmra.mrb[0].mxu0 %v1004
        %v1146 = vpop.f32.mrb[0].mxu0
        %v1147 = vadd.f32 0.0, %v1146
        %v1148 = vpop.f32.mrb[0].mxu0
        %1149 = vdwg.mxu0
        %v1150 = vld [vmem:[#allocation10] sm:$0xff]
        %v1151 = vld [vmem:[#allocation10 + $0x8] sm:$0xff]
        %v1152 = vld [vmem:[#allocation10 + $0x10] sm:$0xff]
        %v1153 = vld [vmem:[#allocation10 + $0x18] sm:$0xff]
        %v1154 = vld [vmem:[#allocation10 + $0x20] sm:$0xff]
        %v1155 = vld [vmem:[#allocation10 + $0x28] sm:$0xff]
        %v1156 = vld [vmem:[#allocation10 + $0x30] sm:$0xff]
        %v1157 = vld [vmem:[#allocation10 + $0x38] sm:$0xff]
        %v1158 = vld [vmem:[#allocation10 + $0x40] sm:$0xff]
        %v1159 = vld [vmem:[#allocation10 + $0x48] sm:$0xff]
        %v1160 = vld [vmem:[#allocation10 + $0x50] sm:$0xff]
        %v1161 = vld [vmem:[#allocation10 + $0x58] sm:$0xff]
        %v1162 = vld [vmem:[#allocation10 + $0x60] sm:$0xff]
        %v1163 = vld [vmem:[#allocation10 + $0x68] sm:$0xff]
        %v1164 = vld [vmem:[#allocation10 + $0x70] sm:$0xff]
        %v1165 = vld [vmem:[#allocation10 + $0x78] sm:$0xff]
        %1166 = vmatprep.subr.mxu0 0.0
        %1167 = vmatpush1.msra.mxu0 %v1150
        %1168 = vmatprep.subr.mxu0 0.0
        %1169 = vmatpush1.msra.mxu0 %v1151
        %1170 = vmatprep.subr.mxu0 0.0
        %1171 = vmatpush1.msra.mxu0 %v1152
        %1172 = vmatprep.subr.mxu0 0.0
        %1173 = vmatpush1.msra.mxu0 %v1153
        %1174 = vmatprep.subr.mxu0 0.0
        %1175 = vmatpush1.msra.mxu0 %v1154
        %1176 = vmatprep.subr.mxu0 0.0
        %1177 = vmatpush1.msra.mxu0 %v1155
        %1178 = vmatprep.subr.mxu0 0.0
        %1179 = vmatpush1.msra.mxu0 %v1156
        %1180 = vmatprep.subr.mxu0 0.0
        %1181 = vmatpush1.msra.mxu0 %v1157
        %1182 = vmatprep.subr.mxu0 0.0
        %1183 = vmatpush1.msra.mxu0 %v1158
        %1184 = vmatprep.subr.mxu0 0.0
        %1185 = vmatpush1.msra.mxu0 %v1159
        %1186 = vmatprep.subr.mxu0 0.0
        %1187 = vmatpush1.msra.mxu0 %v1160
        %1188 = vmatprep.subr.mxu0 0.0
        %1189 = vmatpush1.msra.mxu0 %v1161
        %1190 = vmatprep.subr.mxu0 0.0
        %1191 = vmatpush1.msra.mxu0 %v1162
        %1192 = vmatprep.subr.mxu0 0.0
        %1193 = vmatpush1.msra.mxu0 %v1163
        %1194 = vmatprep.subr.mxu0 0.0
        %1195 = vmatpush1.msra.mxu0 %v1164
        %1196 = vmatprep.subr.mxu0 0.0
        %1197 = vmatpush1.msra.mxu0 %v1165
        %1198 = vmatprep.subr.mxu0 0.0
        %1199 = vmatpush1.msra.mxu0 0.0
        %1200 = vmatprep.subr.mxu0 0.0
        %1201 = vmatpush1.msra.mxu0 0.0
        %1202 = vmatprep.subr.mxu0 0.0
        %1203 = vmatpush1.msra.mxu0 0.0
        %1204 = vmatprep.subr.mxu0 0.0
        %1205 = vmatpush1.msra.mxu0 0.0
        %1206 = vmatprep.subr.mxu0 0.0
        %1207 = vmatpush1.msra.mxu0 0.0
        %1208 = vmatprep.subr.mxu0 0.0
        %1209 = vmatpush1.msra.mxu0 0.0
        %1210 = vmatprep.subr.mxu0 0.0
        %1211 = vmatpush1.msra.mxu0 0.0
        %1212 = vmatprep.subr.mxu0 0.0
        %1213 = vmatpush1.msra.mxu0 0.0
        %1214 = vmatprep.subr.mxu0 0.0
        %1215 = vmatpush1.msra.mxu0 0.0
        %1216 = vmatprep.subr.mxu0 0.0
        %1217 = vmatpush1.msra.mxu0 0.0
        %1218 = vmatprep.subr.mxu0 0.0
        %1219 = vmatpush1.msra.mxu0 0.0
        %1220 = vmatprep.subr.mxu0 0.0
        %1221 = vmatpush1.msra.mxu0 0.0
        %1222 = vmatprep.subr.mxu0 0.0
        %1223 = vmatpush1.msra.mxu0 0.0
        %1224 = vmatprep.subr.mxu0 0.0
        %1225 = vmatpush1.msra.mxu0 0.0
        %1226 = vmatprep.subr.mxu0 0.0
        %1227 = vmatpush1.msra.mxu0 0.0
        %1228 = vmatprep.subr.mxu0 0.0
        %1229 = vmatpush1.msra.mxu0 0.0
        %1230 = vmatprep.mubr.f32.mxu0 0.0
        %1231 = vmatmul.mubr.f32.gmra.mrb[0].mxu0 %v1072
        %v1232 = vpop.f32.mrb[0].mxu0
        %v1233 = vadd.f32 0.0, %v1232
        %v1234 = vpop.f32.mrb[0].mxu0
        %1235 = vmatprep.mubr.f32.mxu0 0.0
        %1236 = vmatmul.mubr.f32.gmra.mrb[0].mxu0 %v1077
        %v1237 = vpop.f32.mrb[0].mxu0
        %v1238 = vadd.f32 0.0, %v1237
        %v1239 = vpop.f32.mrb[0].mxu0
        %1240 = vmatprep.mubr.f32.mxu0 0.0
        %1241 = vmatmul.mubr.f32.gmra.mrb[0].mxu0 %v1082
        %v1242 = vpop.f32.mrb[0].mxu0
        %v1243 = vadd.f32 0.0, %v1242
        %v1244 = vpop.f32.mrb[0].mxu0
        %1245 = vmatprep.mubr.f32.mxu0 0.0
        %1246 = vmatmul.mubr.f32.gmra.mrb[0].mxu0 %v1087
        %v1247 = vpop.f32.mrb[0].mxu0
        %v1248 = vadd.f32 0.0, %v1247
        %v1249 = vpop.f32.mrb[0].mxu0
        %1250 = vmatprep.mubr.f32.mxu0 0.0
        %1251 = vmatmul.mubr.f32.gmra.mrb[0].mxu0 %v1092
        %v1252 = vpop.f32.mrb[0].mxu0
        %v1253 = vadd.f32 0.0, %v1252
        %v1254 = vpop.f32.mrb[0].mxu0
        %1255 = vmatprep.mubr.f32.mxu0 0.0
        %1256 = vmatmul.mubr.f32.gmra.mrb[0].mxu0 %v1097
        %v1257 = vpop.f32.mrb[0].mxu0
        %v1258 = vadd.f32 0.0, %v1257
        %v1259 = vpop.f32.mrb[0].mxu0
        %1260 = vmatprep.mubr.f32.mxu0 0.0
        %1261 = vmatmul.mubr.f32.gmra.mrb[0].mxu0 %v1102
        %v1262 = vpop.f32.mrb[0].mxu0
        %v1263 = vadd.f32 0.0, %v1262
        %v1264 = vpop.f32.mrb[0].mxu0
        %1265 = vmatprep.mubr.f32.mxu0 0.0
        %1266 = vmatmul.mubr.f32.gmra.mrb[0].mxu0 %v1107
        %v1267 = vpop.f32.mrb[0].mxu0
        %v1268 = vadd.f32 0.0, %v1267
        %v1269 = vpop.f32.mrb[0].mxu0
        %1270 = vmatprep.mubr.f32.mxu0 0.0
        %1271 = vmatmul.mubr.f32.gmra.mrb[0].mxu0 %v1112
        %v1272 = vpop.f32.mrb[0].mxu0
        %v1273 = vadd.f32 0.0, %v1272
        %v1274 = vpop.f32.mrb[0].mxu0
        %1275 = vmatprep.mubr.f32.mxu0 0.0
        %1276 = vmatmul.mubr.f32.gmra.mrb[0].mxu0 %v1117
        %v1277 = vpop.f32.mrb[0].mxu0
        %v1278 = vadd.f32 0.0, %v1277
        %v1279 = vpop.f32.mrb[0].mxu0
        %1280 = vmatprep.mubr.f32.mxu0 0.0
        %1281 = vmatmul.mubr.f32.gmra.mrb[0].mxu0 %v1122
        %v1282 = vpop.f32.mrb[0].mxu0
        %v1283 = vadd.f32 0.0, %v1282
        %v1284 = vpop.f32.mrb[0].mxu0
        %1285 = vmatprep.mubr.f32.mxu0 0.0
        %1286 = vmatmul.mubr.f32.gmra.mrb[0].mxu0 %v1127
        %v1287 = vpop.f32.mrb[0].mxu0
        %v1288 = vadd.f32 0.0, %v1287
        %v1289 = vpop.f32.mrb[0].mxu0
        %1290 = vmatprep.mubr.f32.mxu0 0.0
        %1291 = vmatmul.mubr.f32.gmra.mrb[0].mxu0 %v1132
        %v1292 = vpop.f32.mrb[0].mxu0
        %v1293 = vadd.f32 0.0, %v1292
        %v1294 = vpop.f32.mrb[0].mxu0
        %1295 = vmatprep.mubr.f32.mxu0 0.0
        %1296 = vmatmul.mubr.f32.gmra.mrb[0].mxu0 %v1137
        %v1297 = vpop.f32.mrb[0].mxu0
        %v1298 = vadd.f32 0.0, %v1297
        %v1299 = vpop.f32.mrb[0].mxu0
        %1300 = vmatprep.mubr.f32.mxu0 0.0
        %1301 = vmatmul.mubr.f32.gmra.mrb[0].mxu0 %v1142
        %v1302 = vpop.f32.mrb[0].mxu0
        %v1303 = vadd.f32 0.0, %v1302
        %v1304 = vpop.f32.mrb[0].mxu0
        %1305 = vmatprep.mubr.f32.mxu0 0.0
        %1306 = vmatmul.mubr.f32.gmra.mrb[0].mxu0 %v1147
        %v1307 = vpop.f32.mrb[0].mxu0
        %v1308 = vadd.f32 0.0, %v1307
        %v1309 = vpop.f32.mrb[0].mxu0
        %1310 = vdwg.mxu0
        %v1311 = vsel %vm701, %v1233, 1e+10
        %v1312 = vsel %vm702, %v1238, 1e+10
        %v1313 = vsel %vm703, %v1243, 1e+10
        %v1314 = vsel %vm704, %v1248, 1e+10
        %v1315 = vsel %vm705, %v1253, 1e+10
        %v1316 = vsel %vm706, %v1258, 1e+10
        %v1317 = vsel %vm707, %v1263, 1e+10
        %v1318 = vsel %vm708, %v1268, 1e+10
        %v1319 = vsel %vm709, %v1273, 1e+10
        %v1320 = vsel %vm710, %v1278, 1e+10
        %v1321 = vsel %vm711, %v1283, 1e+10
        %v1322 = vsel %vm712, %v1288, 1e+10
        %v1323 = vsel %vm713, %v1293, 1e+10
        %v1324 = vsel %vm714, %v1298, 1e+10
        %v1325 = vsel %vm715, %v1303, 1e+10
        %v1326 = vsel %vm716, %v1308, 1e+10
        %s1327 = sld [smem:[#allocation2]]
        %s1328 = sld [smem:[#allocation3]]
        %s1329 = scvt.s32.f32 %s1328
        %s1330 = smul.f32 %s1327, %s1329
        %v1331 = vstv %s1329
        %v1332 = vrcp.pop %v1331
        %s1333 = vtos %v1332
        %s1334 = smul.f32 %s1330, %s1333
        %v1335 = vmul.f32 %v1311, -1000.0
        %v1336 = vmul.f32 %v1312, -1000.0
        %v1337 = vmul.f32 %v1313, -1000.0
        %v1338 = vmul.f32 %v1314, -1000.0
        %v1339 = vmul.f32 %v1315, -1000.0
        %v1340 = vmul.f32 %v1316, -1000.0
        %v1341 = vmul.f32 %v1317, -1000.0
        %v1342 = vmul.f32 %v1318, -1000.0
        %v1343 = vmul.f32 %v1319, -1000.0
        %v1344 = vmul.f32 %v1320, -1000.0
        %v1345 = vmul.f32 %v1321, -1000.0
        %v1346 = vmul.f32 %v1322, -1000.0
        %v1347 = vmul.f32 %v1323, -1000.0
        %v1348 = vmul.f32 %v1324, -1000.0
        %v1349 = vmul.f32 %v1325, -1000.0
        %v1350 = vmul.f32 %v1326, -1000.0
        %v1351 = vmul.f32 %v1335, 1.442695
        %v1352 = vpow.pop %v1351
        %v1353 = vmul.f32 %v1336, 1.442695
        %v1354 = vpow.pop %v1353
        %v1355 = vmul.f32 %v1337, 1.442695
        %v1356 = vpow.pop %v1355
        %v1357 = vmul.f32 %v1338, 1.442695
        %v1358 = vpow.pop %v1357
        %v1359 = vmul.f32 %v1339, 1.442695
        %v1360 = vpow.pop %v1359
        %v1361 = vmul.f32 %v1340, 1.442695
        %v1362 = vpow.pop %v1361
        %v1363 = vmul.f32 %v1341, 1.442695
        %v1364 = vpow.pop %v1363
        %v1365 = vmul.f32 %v1342, 1.442695
        %v1366 = vpow.pop %v1365
        %v1367 = vmul.f32 %v1343, 1.442695
        %v1368 = vpow.pop %v1367
        %v1369 = vmul.f32 %v1344, 1.442695
        %v1370 = vpow.pop %v1369
        %v1371 = vmul.f32 %v1345, 1.442695
        %v1372 = vpow.pop %v1371
        %v1373 = vmul.f32 %v1346, 1.442695
        %v1374 = vpow.pop %v1373
        %v1375 = vmul.f32 %v1347, 1.442695
        %v1376 = vpow.pop %v1375
        %v1377 = vmul.f32 %v1348, 1.442695
        %v1378 = vpow.pop %v1377
        %v1379 = vmul.f32 %v1349, 1.442695
        %v1380 = vpow.pop %v1379
        %v1381 = vmul.f32 %v1350, 1.442695
        %v1382 = vpow.pop %v1381
        %s1383 = sadd.f32 %s1330, 1.0
        // While loop
        $region61: #{tpu_custom_call.1} parent=43 // loop_pre_header
          _
        $region62: #{tpu_custom_call.1} parent=43 // loop_header
          %s1385 = sphi 1000.0, %s1410
          %v1386 = vphi %v1352, %v1411
          %v1387 = vphi %v1354, %v1412
          %v1388 = vphi %v1356, %v1413
          %v1389 = vphi %v1358, %v1414
          %v1390 = vphi %v1360, %v1415
          %v1391 = vphi %v1362, %v1416
          %v1392 = vphi %v1364, %v1417
          %v1393 = vphi %v1366, %v1418
          %v1394 = vphi %v1368, %v1419
          %v1395 = vphi %v1370, %v1420
          %v1396 = vphi %v1372, %v1421
          %v1397 = vphi %v1374, %v1422
          %v1398 = vphi %v1376, %v1423
          %v1399 = vphi %v1378, %v1424
          %v1400 = vphi %v1380, %v1425
          %v1401 = vphi %v1382, %v1426
          %s1402 = sphi %s1383, %s1662
          %s1403 = sphi 0, %s1663
          %p1404 = scmp.gt.f32.partialorder %s1402, %s1330
          %p1405 = scmp.le.s32.totalorder %s1403, 10
          %p1406 = pnand %p1404, %p1405
          %p1407 = pneg %p1406
        $region63: #{tpu_custom_call.1} parent=43 // loop_header_branch
          %1409 = sbr.rel (%p1406) target = $region67
        $region64: #{tpu_custom_call.1} parent=43 // loop_body
          %s1410 = smul.f32 %s1385, 2.0
          %v1411 = vmul.f32 %v1386, %v1386
          %v1412 = vmul.f32 %v1387, %v1387
          %v1413 = vmul.f32 %v1388, %v1388
          %v1414 = vmul.f32 %v1389, %v1389
          %v1415 = vmul.f32 %v1390, %v1390
          %v1416 = vmul.f32 %v1391, %v1391
          %v1417 = vmul.f32 %v1392, %v1392
          %v1418 = vmul.f32 %v1393, %v1393
          %v1419 = vmul.f32 %v1394, %v1394
          %v1420 = vmul.f32 %v1395, %v1395
          %v1421 = vmul.f32 %v1396, %v1396
          %v1422 = vmul.f32 %v1397, %v1397
          %v1423 = vmul.f32 %v1398, %v1398
          %v1424 = vmul.f32 %v1399, %v1399
          %v1425 = vmul.f32 %v1400, %v1400
          %v1426 = vmul.f32 %v1401, %v1401
          %v1427 = vmul.f32 %v1411, 2.0
          %v1428 = vmul.f32 %v1412, 2.0
          %v1429 = vmul.f32 %v1413, 2.0
          %v1430 = vmul.f32 %v1414, 2.0
          %v1431 = vmul.f32 %v1415, 2.0
          %v1432 = vmul.f32 %v1416, 2.0
          %v1433 = vmul.f32 %v1417, 2.0
          %v1434 = vmul.f32 %v1418, 2.0
          %v1435 = vmul.f32 %v1419, 2.0
          %v1436 = vmul.f32 %v1420, 2.0
          %v1437 = vmul.f32 %v1421, 2.0
          %v1438 = vmul.f32 %v1422, 2.0
          %v1439 = vmul.f32 %v1423, 2.0
          %v1440 = vmul.f32 %v1424, 2.0
          %v1441 = vmul.f32 %v1425, 2.0
          %v1442 = vmul.f32 %v1426, 2.0
          %v1443 = vadd.f32 %v1427, 1.0
          %v1444 = vadd.f32 %v1428, 1.0
          %v1445 = vadd.f32 %v1429, 1.0
          %v1446 = vadd.f32 %v1430, 1.0
          %v1447 = vadd.f32 %v1431, 1.0
          %v1448 = vadd.f32 %v1432, 1.0
          %v1449 = vadd.f32 %v1433, 1.0
          %v1450 = vadd.f32 %v1434, 1.0
          %v1451 = vadd.f32 %v1435, 1.0
          %v1452 = vadd.f32 %v1436, 1.0
          %v1453 = vadd.f32 %v1437, 1.0
          %v1454 = vadd.f32 %v1438, 1.0
          %v1455 = vadd.f32 %v1439, 1.0
          %v1456 = vadd.f32 %v1440, 1.0
          %v1457 = vadd.f32 %v1441, 1.0
          %v1458 = vadd.f32 %v1442, 1.0
          %v1459 = vrcp.pop %v1443
          %v1460 = vrcp.pop %v1444
          %v1461 = vrcp.pop %v1445
          %v1462 = vrcp.pop %v1446
          %v1463 = vrcp.pop %v1447
          %v1464 = vrcp.pop %v1448
          %v1465 = vrcp.pop %v1449
          %v1466 = vrcp.pop %v1450
          %v1467 = vrcp.pop %v1451
          %v1468 = vrcp.pop %v1452
          %v1469 = vrcp.pop %v1453
          %v1470 = vrcp.pop %v1454
          %v1471 = vrcp.pop %v1455
          %v1472 = vrcp.pop %v1456
          %v1473 = vrcp.pop %v1457
          %v1474 = vrcp.pop %v1458
          %v1475 = vmul.f32 %v1427, %v1459
          %v1476 = vmul.f32 %v1428, %v1460
          %v1477 = vmul.f32 %v1429, %v1461
          %v1478 = vmul.f32 %v1430, %v1462
          %v1479 = vmul.f32 %v1431, %v1463
          %v1480 = vmul.f32 %v1432, %v1464
          %v1481 = vmul.f32 %v1433, %v1465
          %v1482 = vmul.f32 %v1434, %v1466
          %v1483 = vmul.f32 %v1435, %v1467
          %v1484 = vmul.f32 %v1436, %v1468
          %v1485 = vmul.f32 %v1437, %v1469
          %v1486 = vmul.f32 %v1438, %v1470
          %v1487 = vmul.f32 %v1439, %v1471
          %v1488 = vmul.f32 %v1440, %v1472
          %v1489 = vmul.f32 %v1441, %v1473
          %v1490 = vmul.f32 %v1442, %v1474
          %v1491 = vlog2.pop %v1443
          %v1492 = vmul.f32 %v1491, 0.6931472
          %v1493 = vlog2.pop %v1444
          %v1494 = vmul.f32 %v1493, 0.6931472
          %v1495 = vlog2.pop %v1445
          %v1496 = vmul.f32 %v1495, 0.6931472
          %v1497 = vlog2.pop %v1446
          %v1498 = vmul.f32 %v1497, 0.6931472
          %v1499 = vlog2.pop %v1447
          %v1500 = vmul.f32 %v1499, 0.6931472
          %v1501 = vlog2.pop %v1448
          %v1502 = vmul.f32 %v1501, 0.6931472
          %v1503 = vlog2.pop %v1449
          %v1504 = vmul.f32 %v1503, 0.6931472
          %v1505 = vlog2.pop %v1450
          %v1506 = vmul.f32 %v1505, 0.6931472
          %v1507 = vlog2.pop %v1451
          %v1508 = vmul.f32 %v1507, 0.6931472
          %v1509 = vlog2.pop %v1452
          %v1510 = vmul.f32 %v1509, 0.6931472
          %v1511 = vlog2.pop %v1453
          %v1512 = vmul.f32 %v1511, 0.6931472
          %v1513 = vlog2.pop %v1454
          %v1514 = vmul.f32 %v1513, 0.6931472
          %v1515 = vlog2.pop %v1455
          %v1516 = vmul.f32 %v1515, 0.6931472
          %v1517 = vlog2.pop %v1456
          %v1518 = vmul.f32 %v1517, 0.6931472
          %v1519 = vlog2.pop %v1457
          %v1520 = vmul.f32 %v1519, 0.6931472
          %v1521 = vlog2.pop %v1458
          %v1522 = vmul.f32 %v1521, 0.6931472
          %v1523 = vrcp.pop 0.6931472
          %v1524 = vmul.f32 %v1492, %v1523
          %v1525 = vmul.f32 %v1494, %v1523
          %v1526 = vmul.f32 %v1496, %v1523
          %v1527 = vmul.f32 %v1498, %v1523
          %v1528 = vmul.f32 %v1500, %v1523
          %v1529 = vmul.f32 %v1502, %v1523
          %v1530 = vmul.f32 %v1504, %v1523
          %v1531 = vmul.f32 %v1506, %v1523
          %v1532 = vmul.f32 %v1508, %v1523
          %v1533 = vmul.f32 %v1510, %v1523
          %v1534 = vmul.f32 %v1512, %v1523
          %v1535 = vmul.f32 %v1514, %v1523
          %v1536 = vmul.f32 %v1516, %v1523
          %v1537 = vmul.f32 %v1518, %v1523
          %v1538 = vmul.f32 %v1520, %v1523
          %v1539 = vmul.f32 %v1522, %v1523
          %s1540 = smul.f32 %s1410, 1.442695
          %v1541 = vmul.f32 %v1311, %v1475
          %v1542 = vmul.f32 %v1312, %v1476
          %v1543 = vmul.f32 %v1313, %v1477
          %v1544 = vmul.f32 %v1314, %v1478
          %v1545 = vmul.f32 %v1315, %v1479
          %v1546 = vmul.f32 %v1316, %v1480
          %v1547 = vmul.f32 %v1317, %v1481
          %v1548 = vmul.f32 %v1318, %v1482
          %v1549 = vmul.f32 %v1319, %v1483
          %v1550 = vmul.f32 %v1320, %v1484
          %v1551 = vmul.f32 %v1321, %v1485
          %v1552 = vmul.f32 %v1322, %v1486
          %v1553 = vmul.f32 %v1323, %v1487
          %v1554 = vmul.f32 %v1324, %v1488
          %v1555 = vmul.f32 %v1325, %v1489
          %v1556 = vmul.f32 %v1326, %v1490
          %v1557 = vstv %s1540
          %v1558 = vmul.f32 %v1557, %v1541
          %v1559 = vmul.f32 %v1557, %v1542
          %v1560 = vmul.f32 %v1557, %v1543
          %v1561 = vmul.f32 %v1557, %v1544
          %v1562 = vmul.f32 %v1557, %v1545
          %v1563 = vmul.f32 %v1557, %v1546
          %v1564 = vmul.f32 %v1557, %v1547
          %v1565 = vmul.f32 %v1557, %v1548
          %v1566 = vmul.f32 %v1557, %v1549
          %v1567 = vmul.f32 %v1557, %v1550
          %v1568 = vmul.f32 %v1557, %v1551
          %v1569 = vmul.f32 %v1557, %v1552
          %v1570 = vmul.f32 %v1557, %v1553
          %v1571 = vmul.f32 %v1557, %v1554
          %v1572 = vmul.f32 %v1557, %v1555
          %v1573 = vmul.f32 %v1557, %v1556
          %v1574 = vadd.f32 %v1524, %v1558
          %v1575 = vadd.f32 %v1525, %v1559
          %v1576 = vadd.f32 %v1526, %v1560
          %v1577 = vadd.f32 %v1527, %v1561
          %v1578 = vadd.f32 %v1528, %v1562
          %v1579 = vadd.f32 %v1529, %v1563
          %v1580 = vadd.f32 %v1530, %v1564
          %v1581 = vadd.f32 %v1531, %v1565
          %v1582 = vadd.f32 %v1532, %v1566
          %v1583 = vadd.f32 %v1533, %v1567
          %v1584 = vadd.f32 %v1534, %v1568
          %v1585 = vadd.f32 %v1535, %v1569
          %v1586 = vadd.f32 %v1536, %v1570
          %v1587 = vadd.f32 %v1537, %v1571
          %v1588 = vadd.f32 %v1538, %v1572
          %v1589 = vadd.f32 %v1539, %v1573
          %1590 = vadd.xlane.f32.xlu0 %v1574
          %v1591 = vpop.xlane.xlu0 %1590
          %1592 = vadd.xlane.f32.xlu0 %v1575
          %v1593 = vpop.xlane.xlu0 %1592
          %1594 = vadd.xlane.f32.xlu0 %v1576
          %v1595 = vpop.xlane.xlu0 %1594
          %1596 = vadd.xlane.f32.xlu0 %v1577
          %v1597 = vpop.xlane.xlu0 %1596
          %1598 = vadd.xlane.f32.xlu0 %v1578
          %v1599 = vpop.xlane.xlu0 %1598
          %1600 = vadd.xlane.f32.xlu0 %v1579
          %v1601 = vpop.xlane.xlu0 %1600
          %1602 = vadd.xlane.f32.xlu0 %v1580
          %v1603 = vpop.xlane.xlu0 %1602
          %1604 = vadd.xlane.f32.xlu0 %v1581
          %v1605 = vpop.xlane.xlu0 %1604
          %1606 = vadd.xlane.f32.xlu0 %v1582
          %v1607 = vpop.xlane.xlu0 %1606
          %1608 = vadd.xlane.f32.xlu0 %v1583
          %v1609 = vpop.xlane.xlu0 %1608
          %1610 = vadd.xlane.f32.xlu0 %v1584
          %v1611 = vpop.xlane.xlu0 %1610
          %1612 = vadd.xlane.f32.xlu0 %v1585
          %v1613 = vpop.xlane.xlu0 %1612
          %1614 = vadd.xlane.f32.xlu0 %v1586
          %v1615 = vpop.xlane.xlu0 %1614
          %1616 = vadd.xlane.f32.xlu0 %v1587
          %v1617 = vpop.xlane.xlu0 %1616
          %1618 = vadd.xlane.f32.xlu0 %v1588
          %v1619 = vpop.xlane.xlu0 %1618
          %1620 = vadd.xlane.f32.xlu0 %v1589
          %v1621 = vpop.xlane.xlu0 %1620
          %vm1622 = vcmask 7168
          %v1623 = vsel %vm1622, %v1591, 0.0
          %v1624 = vsel %vm1622, %v1593, 0.0
          %v1625 = vadd.f32 %v1623, %v1624
          %v1626 = vsel %vm1622, %v1595, 0.0
          %v1627 = vadd.f32 %v1625, %v1626
          %v1628 = vsel %vm1622, %v1597, 0.0
          %v1629 = vadd.f32 %v1627, %v1628
          %v1630 = vsel %vm1622, %v1599, 0.0
          %v1631 = vadd.f32 %v1629, %v1630
          %v1632 = vsel %vm1622, %v1601, 0.0
          %v1633 = vadd.f32 %v1631, %v1632
          %v1634 = vsel %vm1622, %v1603, 0.0
          %v1635 = vadd.f32 %v1633, %v1634
          %v1636 = vsel %vm1622, %v1605, 0.0
          %v1637 = vadd.f32 %v1635, %v1636
          %v1638 = vsel %vm1622, %v1607, 0.0
          %v1639 = vadd.f32 %v1637, %v1638
          %v1640 = vsel %vm1622, %v1609, 0.0
          %v1641 = vadd.f32 %v1639, %v1640
          %v1642 = vsel %vm1622, %v1611, 0.0
          %v1643 = vadd.f32 %v1641, %v1642
          %v1644 = vsel %vm1622, %v1613, 0.0
          %v1645 = vadd.f32 %v1643, %v1644
          %v1646 = vsel %vm1622, %v1615, 0.0
          %v1647 = vadd.f32 %v1645, %v1646
          %v1648 = vsel %vm1622, %v1617, 0.0
          %v1649 = vadd.f32 %v1647, %v1648
          %v1650 = vsel %vm1622, %v1619, 0.0
          %v1651 = vadd.f32 %v1649, %v1650
          %v1652 = vsel %vm1622, %v1621, 0.0
          %v1653 = vadd.f32 %v1651, %v1652
          %1654 = vadd.xlane.f32.xlu0 %v1653
          %v1655 = vpop.xlane.xlu0 %1654
          %v1656 = vrot.slane %v1655, 4
          %v1657 = vadd.f32 %v1655, %v1656
          %v1658 = vrot.slane %v1657, 2
          %v1659 = vadd.f32 %v1657, %v1658
          %v1660 = vrot.slane %v1659, 1
          %v1661 = vadd.f32 %v1659, %v1660
          %s1662 = vtos %v1661
          %s1663 = sadd.s32 %s1403, 1
        $region65: #{tpu_custom_call.1} parent=43 // loop_footer
          _
        $region66: #{tpu_custom_call.1} parent=43 // loop_footer_branch
          %1384 = sbr.rel target = $region62
        $region67: #{tpu_custom_call.1} parent=43 // loop_exit
          _
        %p1664 = scmp.gt.s32.totalorder %s1403, 10
        // While loop
        $region68: #{tpu_custom_call.1} parent=43 // loop_pre_header
          _
        $region69: #{tpu_custom_call.1} parent=43 // loop_header
          %s1666 = sphi 0.0, %s1981
          %s1667 = sphi %s1385, %s1979
          %s1668 = sphi %s1329, %s1982
          %s1669 = sphi %s1402, %s1980
          %s1670 = sphi 0.0, %s1691
          %s1671 = sphi %s1403, %s1983
          %s1672 = ssub.f32 %s1668, %s1669
          %v1673 = vstv %s1329
          %v1674 = vrcp.pop %v1673
          %s1675 = vtos %v1674
          %s1676 = smul.f32 %s1672, %s1675
          %v1677 = vrcp.pop 1000.0
          %s1678 = vtos %v1677
          %s1679 = smul.f32 %s1334, %s1678
          %p1680 = scmp.gt.f32.partialorder %s1676, %s1679
          %p1681 = scmp.lt.s32.totalorder %s1671, 30
          %p1682 = pnand %p1680, %p1681
          %p1683 = pneg %p1682
          %p1684 = scmp.le.s32.totalorder %s1403, 10
          %p1685 = pnand %p1683, %p1684
          %p1686 = pneg %p1685
        $region70: #{tpu_custom_call.1} parent=43 // loop_header_branch
          %1688 = sbr.rel (%p1685) target = $region74
        $region71: #{tpu_custom_call.1} parent=43 // loop_body
          %s1689 = ssub.f32 %s1667, %s1666
          %s1690 = smul.f32 %s1689, 0.5
          %s1691 = sadd.f32 %s1666, %s1690
          %s1692 = ssub.f32 0.0, %s1691
          %v1693 = vstv %s1692
          %v1694 = vmul.f32 %v1693, %v1311
          %v1695 = vmul.f32 %v1693, %v1312
          %v1696 = vmul.f32 %v1693, %v1313
          %v1697 = vmul.f32 %v1693, %v1314
          %v1698 = vmul.f32 %v1693, %v1315
          %v1699 = vmul.f32 %v1693, %v1316
          %v1700 = vmul.f32 %v1693, %v1317
          %v1701 = vmul.f32 %v1693, %v1318
          %v1702 = vmul.f32 %v1693, %v1319
          %v1703 = vmul.f32 %v1693, %v1320
          %v1704 = vmul.f32 %v1693, %v1321
          %v1705 = vmul.f32 %v1693, %v1322
          %v1706 = vmul.f32 %v1693, %v1323
          %v1707 = vmul.f32 %v1693, %v1324
          %v1708 = vmul.f32 %v1693, %v1325
          %v1709 = vmul.f32 %v1693, %v1326
          %v1710 = vmul.f32 %v1694, 1.442695
          %v1711 = vpow.pop %v1710
          %v1712 = vmul.f32 %v1695, 1.442695
          %v1713 = vpow.pop %v1712
          %v1714 = vmul.f32 %v1696, 1.442695
          %v1715 = vpow.pop %v1714
          %v1716 = vmul.f32 %v1697, 1.442695
          %v1717 = vpow.pop %v1716
          %v1718 = vmul.f32 %v1698, 1.442695
          %v1719 = vpow.pop %v1718
          %v1720 = vmul.f32 %v1699, 1.442695
          %v1721 = vpow.pop %v1720
          %v1722 = vmul.f32 %v1700, 1.442695
          %v1723 = vpow.pop %v1722
          %v1724 = vmul.f32 %v1701, 1.442695
          %v1725 = vpow.pop %v1724
          %v1726 = vmul.f32 %v1702, 1.442695
          %v1727 = vpow.pop %v1726
          %v1728 = vmul.f32 %v1703, 1.442695
          %v1729 = vpow.pop %v1728
          %v1730 = vmul.f32 %v1704, 1.442695
          %v1731 = vpow.pop %v1730
          %v1732 = vmul.f32 %v1705, 1.442695
          %v1733 = vpow.pop %v1732
          %v1734 = vmul.f32 %v1706, 1.442695
          %v1735 = vpow.pop %v1734
          %v1736 = vmul.f32 %v1707, 1.442695
          %v1737 = vpow.pop %v1736
          %v1738 = vmul.f32 %v1708, 1.442695
          %v1739 = vpow.pop %v1738
          %v1740 = vmul.f32 %v1709, 1.442695
          %v1741 = vpow.pop %v1740
          %v1742 = vmul.f32 %v1711, 2.0
          %v1743 = vmul.f32 %v1713, 2.0
          %v1744 = vmul.f32 %v1715, 2.0
          %v1745 = vmul.f32 %v1717, 2.0
          %v1746 = vmul.f32 %v1719, 2.0
          %v1747 = vmul.f32 %v1721, 2.0
          %v1748 = vmul.f32 %v1723, 2.0
          %v1749 = vmul.f32 %v1725, 2.0
          %v1750 = vmul.f32 %v1727, 2.0
          %v1751 = vmul.f32 %v1729, 2.0
          %v1752 = vmul.f32 %v1731, 2.0
          %v1753 = vmul.f32 %v1733, 2.0
          %v1754 = vmul.f32 %v1735, 2.0
          %v1755 = vmul.f32 %v1737, 2.0
          %v1756 = vmul.f32 %v1739, 2.0
          %v1757 = vmul.f32 %v1741, 2.0
          %v1758 = vadd.f32 %v1742, 1.0
          %v1759 = vadd.f32 %v1743, 1.0
          %v1760 = vadd.f32 %v1744, 1.0
          %v1761 = vadd.f32 %v1745, 1.0
          %v1762 = vadd.f32 %v1746, 1.0
          %v1763 = vadd.f32 %v1747, 1.0
          %v1764 = vadd.f32 %v1748, 1.0
          %v1765 = vadd.f32 %v1749, 1.0
          %v1766 = vadd.f32 %v1750, 1.0
          %v1767 = vadd.f32 %v1751, 1.0
          %v1768 = vadd.f32 %v1752, 1.0
          %v1769 = vadd.f32 %v1753, 1.0
          %v1770 = vadd.f32 %v1754, 1.0
          %v1771 = vadd.f32 %v1755, 1.0
          %v1772 = vadd.f32 %v1756, 1.0
          %v1773 = vadd.f32 %v1757, 1.0
          %v1774 = vrcp.pop %v1758
          %v1775 = vrcp.pop %v1759
          %v1776 = vrcp.pop %v1760
          %v1777 = vrcp.pop %v1761
          %v1778 = vrcp.pop %v1762
          %v1779 = vrcp.pop %v1763
          %v1780 = vrcp.pop %v1764
          %v1781 = vrcp.pop %v1765
          %v1782 = vrcp.pop %v1766
          %v1783 = vrcp.pop %v1767
          %v1784 = vrcp.pop %v1768
          %v1785 = vrcp.pop %v1769
          %v1786 = vrcp.pop %v1770
          %v1787 = vrcp.pop %v1771
          %v1788 = vrcp.pop %v1772
          %v1789 = vrcp.pop %v1773
          %v1790 = vmul.f32 %v1742, %v1774
          %v1791 = vmul.f32 %v1743, %v1775
          %v1792 = vmul.f32 %v1744, %v1776
          %v1793 = vmul.f32 %v1745, %v1777
          %v1794 = vmul.f32 %v1746, %v1778
          %v1795 = vmul.f32 %v1747, %v1779
          %v1796 = vmul.f32 %v1748, %v1780
          %v1797 = vmul.f32 %v1749, %v1781
          %v1798 = vmul.f32 %v1750, %v1782
          %v1799 = vmul.f32 %v1751, %v1783
          %v1800 = vmul.f32 %v1752, %v1784
          %v1801 = vmul.f32 %v1753, %v1785
          %v1802 = vmul.f32 %v1754, %v1786
          %v1803 = vmul.f32 %v1755, %v1787
          %v1804 = vmul.f32 %v1756, %v1788
          %v1805 = vmul.f32 %v1757, %v1789
          %v1806 = vlog2.pop %v1758
          %v1807 = vmul.f32 %v1806, 0.6931472
          %v1808 = vlog2.pop %v1759
          %v1809 = vmul.f32 %v1808, 0.6931472
          %v1810 = vlog2.pop %v1760
          %v1811 = vmul.f32 %v1810, 0.6931472
          %v1812 = vlog2.pop %v1761
          %v1813 = vmul.f32 %v1812, 0.6931472
          %v1814 = vlog2.pop %v1762
          %v1815 = vmul.f32 %v1814, 0.6931472
          %v1816 = vlog2.pop %v1763
          %v1817 = vmul.f32 %v1816, 0.6931472
          %v1818 = vlog2.pop %v1764
          %v1819 = vmul.f32 %v1818, 0.6931472
          %v1820 = vlog2.pop %v1765
          %v1821 = vmul.f32 %v1820, 0.6931472
          %v1822 = vlog2.pop %v1766
          %v1823 = vmul.f32 %v1822, 0.6931472
          %v1824 = vlog2.pop %v1767
          %v1825 = vmul.f32 %v1824, 0.6931472
          %v1826 = vlog2.pop %v1768
          %v1827 = vmul.f32 %v1826, 0.6931472
          %v1828 = vlog2.pop %v1769
          %v1829 = vmul.f32 %v1828, 0.6931472
          %v1830 = vlog2.pop %v1770
          %v1831 = vmul.f32 %v1830, 0.6931472
          %v1832 = vlog2.pop %v1771
          %v1833 = vmul.f32 %v1832, 0.6931472
          %v1834 = vlog2.pop %v1772
          %v1835 = vmul.f32 %v1834, 0.6931472
          %v1836 = vlog2.pop %v1773
          %v1837 = vmul.f32 %v1836, 0.6931472
          %v1838 = vrcp.pop 0.6931472
          %v1839 = vmul.f32 %v1807, %v1838
          %v1840 = vmul.f32 %v1809, %v1838
          %v1841 = vmul.f32 %v1811, %v1838
          %v1842 = vmul.f32 %v1813, %v1838
          %v1843 = vmul.f32 %v1815, %v1838
          %v1844 = vmul.f32 %v1817, %v1838
          %v1845 = vmul.f32 %v1819, %v1838
          %v1846 = vmul.f32 %v1821, %v1838
          %v1847 = vmul.f32 %v1823, %v1838
          %v1848 = vmul.f32 %v1825, %v1838
          %v1849 = vmul.f32 %v1827, %v1838
          %v1850 = vmul.f32 %v1829, %v1838
          %v1851 = vmul.f32 %v1831, %v1838
          %v1852 = vmul.f32 %v1833, %v1838
          %v1853 = vmul.f32 %v1835, %v1838
          %v1854 = vmul.f32 %v1837, %v1838
          %s1855 = smul.f32 %s1691, 1.442695
          %v1856 = vmul.f32 %v1311, %v1790
          %v1857 = vmul.f32 %v1312, %v1791
          %v1858 = vmul.f32 %v1313, %v1792
          %v1859 = vmul.f32 %v1314, %v1793
          %v1860 = vmul.f32 %v1315, %v1794
          %v1861 = vmul.f32 %v1316, %v1795
          %v1862 = vmul.f32 %v1317, %v1796
          %v1863 = vmul.f32 %v1318, %v1797
          %v1864 = vmul.f32 %v1319, %v1798
          %v1865 = vmul.f32 %v1320, %v1799
          %v1866 = vmul.f32 %v1321, %v1800
          %v1867 = vmul.f32 %v1322, %v1801
          %v1868 = vmul.f32 %v1323, %v1802
          %v1869 = vmul.f32 %v1324, %v1803
          %v1870 = vmul.f32 %v1325, %v1804
          %v1871 = vmul.f32 %v1326, %v1805
          %v1872 = vstv %s1855
          %v1873 = vmul.f32 %v1872, %v1856
          %v1874 = vmul.f32 %v1872, %v1857
          %v1875 = vmul.f32 %v1872, %v1858
          %v1876 = vmul.f32 %v1872, %v1859
          %v1877 = vmul.f32 %v1872, %v1860
          %v1878 = vmul.f32 %v1872, %v1861
          %v1879 = vmul.f32 %v1872, %v1862
          %v1880 = vmul.f32 %v1872, %v1863
          %v1881 = vmul.f32 %v1872, %v1864
          %v1882 = vmul.f32 %v1872, %v1865
          %v1883 = vmul.f32 %v1872, %v1866
          %v1884 = vmul.f32 %v1872, %v1867
          %v1885 = vmul.f32 %v1872, %v1868
          %v1886 = vmul.f32 %v1872, %v1869
          %v1887 = vmul.f32 %v1872, %v1870
          %v1888 = vmul.f32 %v1872, %v1871
          %v1889 = vadd.f32 %v1839, %v1873
          %v1890 = vadd.f32 %v1840, %v1874
          %v1891 = vadd.f32 %v1841, %v1875
          %v1892 = vadd.f32 %v1842, %v1876
          %v1893 = vadd.f32 %v1843, %v1877
          %v1894 = vadd.f32 %v1844, %v1878
          %v1895 = vadd.f32 %v1845, %v1879
          %v1896 = vadd.f32 %v1846, %v1880
          %v1897 = vadd.f32 %v1847, %v1881
          %v1898 = vadd.f32 %v1848, %v1882
          %v1899 = vadd.f32 %v1849, %v1883
          %v1900 = vadd.f32 %v1850, %v1884
          %v1901 = vadd.f32 %v1851, %v1885
          %v1902 = vadd.f32 %v1852, %v1886
          %v1903 = vadd.f32 %v1853, %v1887
          %v1904 = vadd.f32 %v1854, %v1888
          %1905 = vadd.xlane.f32.xlu0 %v1889
          %v1906 = vpop.xlane.xlu0 %1905
          %1907 = vadd.xlane.f32.xlu0 %v1890
          %v1908 = vpop.xlane.xlu0 %1907
          %1909 = vadd.xlane.f32.xlu0 %v1891
          %v1910 = vpop.xlane.xlu0 %1909
          %1911 = vadd.xlane.f32.xlu0 %v1892
          %v1912 = vpop.xlane.xlu0 %1911
          %1913 = vadd.xlane.f32.xlu0 %v1893
          %v1914 = vpop.xlane.xlu0 %1913
          %1915 = vadd.xlane.f32.xlu0 %v1894
          %v1916 = vpop.xlane.xlu0 %1915
          %1917 = vadd.xlane.f32.xlu0 %v1895
          %v1918 = vpop.xlane.xlu0 %1917
          %1919 = vadd.xlane.f32.xlu0 %v1896
          %v1920 = vpop.xlane.xlu0 %1919
          %1921 = vadd.xlane.f32.xlu0 %v1897
          %v1922 = vpop.xlane.xlu0 %1921
          %1923 = vadd.xlane.f32.xlu0 %v1898
          %v1924 = vpop.xlane.xlu0 %1923
          %1925 = vadd.xlane.f32.xlu0 %v1899
          %v1926 = vpop.xlane.xlu0 %1925
          %1927 = vadd.xlane.f32.xlu0 %v1900
          %v1928 = vpop.xlane.xlu0 %1927
          %1929 = vadd.xlane.f32.xlu0 %v1901
          %v1930 = vpop.xlane.xlu0 %1929
          %1931 = vadd.xlane.f32.xlu0 %v1902
          %v1932 = vpop.xlane.xlu0 %1931
          %1933 = vadd.xlane.f32.xlu0 %v1903
          %v1934 = vpop.xlane.xlu0 %1933
          %1935 = vadd.xlane.f32.xlu0 %v1904
          %v1936 = vpop.xlane.xlu0 %1935
          %vm1937 = vcmask 7168
          %v1938 = vsel %vm1937, %v1906, 0.0
          %v1939 = vsel %vm1937, %v1908, 0.0
          %v1940 = vadd.f32 %v1938, %v1939
          %v1941 = vsel %vm1937, %v1910, 0.0
          %v1942 = vadd.f32 %v1940, %v1941
          %v1943 = vsel %vm1937, %v1912, 0.0
          %v1944 = vadd.f32 %v1942, %v1943
          %v1945 = vsel %vm1937, %v1914, 0.0
          %v1946 = vadd.f32 %v1944, %v1945
          %v1947 = vsel %vm1937, %v1916, 0.0
          %v1948 = vadd.f32 %v1946, %v1947
          %v1949 = vsel %vm1937, %v1918, 0.0
          %v1950 = vadd.f32 %v1948, %v1949
          %v1951 = vsel %vm1937, %v1920, 0.0
          %v1952 = vadd.f32 %v1950, %v1951
          %v1953 = vsel %vm1937, %v1922, 0.0
          %v1954 = vadd.f32 %v1952, %v1953
          %v1955 = vsel %vm1937, %v1924, 0.0
          %v1956 = vadd.f32 %v1954, %v1955
          %v1957 = vsel %vm1937, %v1926, 0.0
          %v1958 = vadd.f32 %v1956, %v1957
          %v1959 = vsel %vm1937, %v1928, 0.0
          %v1960 = vadd.f32 %v1958, %v1959
          %v1961 = vsel %vm1937, %v1930, 0.0
          %v1962 = vadd.f32 %v1960, %v1961
          %v1963 = vsel %vm1937, %v1932, 0.0
          %v1964 = vadd.f32 %v1962, %v1963
          %v1965 = vsel %vm1937, %v1934, 0.0
          %v1966 = vadd.f32 %v1964, %v1965
          %v1967 = vsel %vm1937, %v1936, 0.0
          %v1968 = vadd.f32 %v1966, %v1967
          %1969 = vadd.xlane.f32.xlu0 %v1968
          %v1970 = vpop.xlane.xlu0 %1969
          %v1971 = vrot.slane %v1970, 4
          %v1972 = vadd.f32 %v1970, %v1971
          %v1973 = vrot.slane %v1972, 2
          %v1974 = vadd.f32 %v1972, %v1973
          %v1975 = vrot.slane %v1974, 1
          %v1976 = vadd.f32 %v1974, %v1975
          %s1977 = vtos %v1976
          %p1978 = scmp.lt.f32.partialorder %s1977, %s1330
          %s1979 = scalar_select %p1978, %s1691, %s1667
          %s1980 = scalar_select %p1978, %s1977, %s1669
          %s1981 = scalar_select %p1978, %s1666, %s1691
          %s1982 = scalar_select %p1978, %s1668, %s1977
          %s1983 = sadd.s32 %s1671, 1
        $region72: #{tpu_custom_call.1} parent=43 // loop_footer
          _
        $region73: #{tpu_custom_call.1} parent=43 // loop_footer_branch
          %1665 = sbr.rel target = $region69
        $region74: #{tpu_custom_call.1} parent=43 // loop_exit
          _
        %s1984 = scalar_select %p1664, %s1385, %s1670
        %s1985 = ssub.f32 0.0, %s1984
        %v1986 = vstv %s1985
        %v1987 = vmul.f32 %v1986, %v1311
        %v1988 = vmul.f32 %v1986, %v1312
        %v1989 = vmul.f32 %v1986, %v1313
        %v1990 = vmul.f32 %v1986, %v1314
        %v1991 = vmul.f32 %v1986, %v1315
        %v1992 = vmul.f32 %v1986, %v1316
        %v1993 = vmul.f32 %v1986, %v1317
        %v1994 = vmul.f32 %v1986, %v1318
        %v1995 = vmul.f32 %v1986, %v1319
        %v1996 = vmul.f32 %v1986, %v1320
        %v1997 = vmul.f32 %v1986, %v1321
        %v1998 = vmul.f32 %v1986, %v1322
        %v1999 = vmul.f32 %v1986, %v1323
        %v2000 = vmul.f32 %v1986, %v1324
        %v2001 = vmul.f32 %v1986, %v1325
        %v2002 = vmul.f32 %v1986, %v1326
        %v2003 = vmul.f32 %v1987, 1.442695
        %v2004 = vpow.pop %v2003
        %v2005 = vmul.f32 %v1988, 1.442695
        %v2006 = vpow.pop %v2005
        %v2007 = vmul.f32 %v1989, 1.442695
        %v2008 = vpow.pop %v2007
        %v2009 = vmul.f32 %v1990, 1.442695
        %v2010 = vpow.pop %v2009
        %v2011 = vmul.f32 %v1991, 1.442695
        %v2012 = vpow.pop %v2011
        %v2013 = vmul.f32 %v1992, 1.442695
        %v2014 = vpow.pop %v2013
        %v2015 = vmul.f32 %v1993, 1.442695
        %v2016 = vpow.pop %v2015
        %v2017 = vmul.f32 %v1994, 1.442695
        %v2018 = vpow.pop %v2017
        %v2019 = vmul.f32 %v1995, 1.442695
        %v2020 = vpow.pop %v2019
        %v2021 = vmul.f32 %v1996, 1.442695
        %v2022 = vpow.pop %v2021
        %v2023 = vmul.f32 %v1997, 1.442695
        %v2024 = vpow.pop %v2023
        %v2025 = vmul.f32 %v1998, 1.442695
        %v2026 = vpow.pop %v2025
        %v2027 = vmul.f32 %v1999, 1.442695
        %v2028 = vpow.pop %v2027
        %v2029 = vmul.f32 %v2000, 1.442695
        %v2030 = vpow.pop %v2029
        %v2031 = vmul.f32 %v2001, 1.442695
        %v2032 = vpow.pop %v2031
        %v2033 = vmul.f32 %v2002, 1.442695
        %v2034 = vpow.pop %v2033
        %v2035 = vmul.f32 %v2004, 2.0
        %v2036 = vmul.f32 %v2006, 2.0
        %v2037 = vmul.f32 %v2008, 2.0
        %v2038 = vmul.f32 %v2010, 2.0
        %v2039 = vmul.f32 %v2012, 2.0
        %v2040 = vmul.f32 %v2014, 2.0
        %v2041 = vmul.f32 %v2016, 2.0
        %v2042 = vmul.f32 %v2018, 2.0
        %v2043 = vmul.f32 %v2020, 2.0
        %v2044 = vmul.f32 %v2022, 2.0
        %v2045 = vmul.f32 %v2024, 2.0
        %v2046 = vmul.f32 %v2026, 2.0
        %v2047 = vmul.f32 %v2028, 2.0
        %v2048 = vmul.f32 %v2030, 2.0
        %v2049 = vmul.f32 %v2032, 2.0
        %v2050 = vmul.f32 %v2034, 2.0
        %v2051 = vadd.f32 %v2035, 1.0
        %v2052 = vadd.f32 %v2036, 1.0
        %v2053 = vadd.f32 %v2037, 1.0
        %v2054 = vadd.f32 %v2038, 1.0
        %v2055 = vadd.f32 %v2039, 1.0
        %v2056 = vadd.f32 %v2040, 1.0
        %v2057 = vadd.f32 %v2041, 1.0
        %v2058 = vadd.f32 %v2042, 1.0
        %v2059 = vadd.f32 %v2043, 1.0
        %v2060 = vadd.f32 %v2044, 1.0
        %v2061 = vadd.f32 %v2045, 1.0
        %v2062 = vadd.f32 %v2046, 1.0
        %v2063 = vadd.f32 %v2047, 1.0
        %v2064 = vadd.f32 %v2048, 1.0
        %v2065 = vadd.f32 %v2049, 1.0
        %v2066 = vadd.f32 %v2050, 1.0
        %v2067 = vrcp.pop %v2051
        %v2068 = vrcp.pop %v2052
        %v2069 = vrcp.pop %v2053
        %v2070 = vrcp.pop %v2054
        %v2071 = vrcp.pop %v2055
        %v2072 = vrcp.pop %v2056
        %v2073 = vrcp.pop %v2057
        %v2074 = vrcp.pop %v2058
        %v2075 = vrcp.pop %v2059
        %v2076 = vrcp.pop %v2060
        %v2077 = vrcp.pop %v2061
        %v2078 = vrcp.pop %v2062
        %v2079 = vrcp.pop %v2063
        %v2080 = vrcp.pop %v2064
        %v2081 = vrcp.pop %v2065
        %v2082 = vrcp.pop %v2066
        %v2083 = vmul.f32 %v2004, %v2067
        %v2084 = vmul.f32 %v2006, %v2068
        %v2085 = vmul.f32 %v2008, %v2069
        %v2086 = vmul.f32 %v2010, %v2070
        %v2087 = vmul.f32 %v2012, %v2071
        %v2088 = vmul.f32 %v2014, %v2072
        %v2089 = vmul.f32 %v2016, %v2073
        %v2090 = vmul.f32 %v2018, %v2074
        %v2091 = vmul.f32 %v2020, %v2075
        %v2092 = vmul.f32 %v2022, %v2076
        %v2093 = vmul.f32 %v2024, %v2077
        %v2094 = vmul.f32 %v2026, %v2078
        %v2095 = vmul.f32 %v2028, %v2079
        %v2096 = vmul.f32 %v2030, %v2080
        %v2097 = vmul.f32 %v2032, %v2081
        %v2098 = vmul.f32 %v2034, %v2082
        %v2099 = vld [vmem:[%s299] sm:$0xff]
        %v2100 = vld [vmem:[%s299 + $0x8] sm:$0xff]
        %v2101 = vld [vmem:[%s299 + $0x10] sm:$0xff]
        %v2102 = vld [vmem:[%s299 + $0x18] sm:$0xff]
        %v2103 = vld [vmem:[%s299 + $0x20] sm:$0xff]
        %v2104 = vld [vmem:[%s299 + $0x28] sm:$0xff]
        %v2105 = vld [vmem:[%s299 + $0x30] sm:$0xff]
        %v2106 = vld [vmem:[%s299 + $0x38] sm:$0xff]
        %v2107 = vld [vmem:[%s299 + $0x40] sm:$0xff]
        %v2108 = vld [vmem:[%s299 + $0x48] sm:$0xff]
        %v2109 = vld [vmem:[%s299 + $0x50] sm:$0xff]
        %v2110 = vld [vmem:[%s299 + $0x58] sm:$0xff]
        %v2111 = vld [vmem:[%s299 + $0x60] sm:$0xff]
        %v2112 = vld [vmem:[%s299 + $0x68] sm:$0xff]
        %v2113 = vld [vmem:[%s299 + $0x70] sm:$0xff]
        %v2114 = vld [vmem:[%s299 + $0x78] sm:$0xff]
        %vm2115 = vcmp.lt.f32.partialorder %v2099, %v2083
        %vm2116 = vcmp.lt.f32.partialorder %v2100, %v2084
        %vm2117 = vcmp.lt.f32.partialorder %v2101, %v2085
        %vm2118 = vcmp.lt.f32.partialorder %v2102, %v2086
        %vm2119 = vcmp.lt.f32.partialorder %v2103, %v2087
        %vm2120 = vcmp.lt.f32.partialorder %v2104, %v2088
        %vm2121 = vcmp.lt.f32.partialorder %v2105, %v2089
        %vm2122 = vcmp.lt.f32.partialorder %v2106, %v2090
        %vm2123 = vcmp.lt.f32.partialorder %v2107, %v2091
        %vm2124 = vcmp.lt.f32.partialorder %v2108, %v2092
        %vm2125 = vcmp.lt.f32.partialorder %v2109, %v2093
        %vm2126 = vcmp.lt.f32.partialorder %v2110, %v2094
        %vm2127 = vcmp.lt.f32.partialorder %v2111, %v2095
        %vm2128 = vcmp.lt.f32.partialorder %v2112, %v2096
        %vm2129 = vcmp.lt.f32.partialorder %v2113, %v2097
        %vm2130 = vcmp.lt.f32.partialorder %v2114, %v2098
        %v2131 = vsub.f32 1.0, %v2083
        %v2132 = vsub.f32 1.0, %v2084
        %v2133 = vsub.f32 1.0, %v2085
        %v2134 = vsub.f32 1.0, %v2086
        %v2135 = vsub.f32 1.0, %v2087
        %v2136 = vsub.f32 1.0, %v2088
        %v2137 = vsub.f32 1.0, %v2089
        %v2138 = vsub.f32 1.0, %v2090
        %v2139 = vsub.f32 1.0, %v2091
        %v2140 = vsub.f32 1.0, %v2092
        %v2141 = vsub.f32 1.0, %v2093
        %v2142 = vsub.f32 1.0, %v2094
        %v2143 = vsub.f32 1.0, %v2095
        %v2144 = vsub.f32 1.0, %v2096
        %v2145 = vsub.f32 1.0, %v2097
        %v2146 = vsub.f32 1.0, %v2098
        %vm2147 = vcmp.ge.f32.partialorder %v2099, %v2131
        %vm2148 = vcmp.ge.f32.partialorder %v2100, %v2132
        %vm2149 = vcmp.ge.f32.partialorder %v2101, %v2133
        %vm2150 = vcmp.ge.f32.partialorder %v2102, %v2134
        %vm2151 = vcmp.ge.f32.partialorder %v2103, %v2135
        %vm2152 = vcmp.ge.f32.partialorder %v2104, %v2136
        %vm2153 = vcmp.ge.f32.partialorder %v2105, %v2137
        %vm2154 = vcmp.ge.f32.partialorder %v2106, %v2138
        %vm2155 = vcmp.ge.f32.partialorder %v2107, %v2139
        %vm2156 = vcmp.ge.f32.partialorder %v2108, %v2140
        %vm2157 = vcmp.ge.f32.partialorder %v2109, %v2141
        %vm2158 = vcmp.ge.f32.partialorder %v2110, %v2142
        %vm2159 = vcmp.ge.f32.partialorder %v2111, %v2143
        %vm2160 = vcmp.ge.f32.partialorder %v2112, %v2144
        %vm2161 = vcmp.ge.f32.partialorder %v2113, %v2145
        %vm2162 = vcmp.ge.f32.partialorder %v2114, %v2146
        %v2163 = vsel %vm2147, -1.0, 0.0
        %v2164 = vsel %vm2148, -1.0, 0.0
        %v2165 = vsel %vm2149, -1.0, 0.0
        %v2166 = vsel %vm2150, -1.0, 0.0
        %v2167 = vsel %vm2151, -1.0, 0.0
        %v2168 = vsel %vm2152, -1.0, 0.0
        %v2169 = vsel %vm2153, -1.0, 0.0
        %v2170 = vsel %vm2154, -1.0, 0.0
        %v2171 = vsel %vm2155, -1.0, 0.0
        %v2172 = vsel %vm2156, -1.0, 0.0
        %v2173 = vsel %vm2157, -1.0, 0.0
        %v2174 = vsel %vm2158, -1.0, 0.0
        %v2175 = vsel %vm2159, -1.0, 0.0
        %v2176 = vsel %vm2160, -1.0, 0.0
        %v2177 = vsel %vm2161, -1.0, 0.0
        %v2178 = vsel %vm2162, -1.0, 0.0
        %v2179 = vsel %vm2115, 1.0, %v2163
        %v2180 = vsel %vm2116, 1.0, %v2164
        %v2181 = vsel %vm2117, 1.0, %v2165
        %v2182 = vsel %vm2118, 1.0, %v2166
        %v2183 = vsel %vm2119, 1.0, %v2167
        %v2184 = vsel %vm2120, 1.0, %v2168
        %v2185 = vsel %vm2121, 1.0, %v2169
        %v2186 = vsel %vm2122, 1.0, %v2170
        %v2187 = vsel %vm2123, 1.0, %v2171
        %v2188 = vsel %vm2124, 1.0, %v2172
        %v2189 = vsel %vm2125, 1.0, %v2173
        %v2190 = vsel %vm2126, 1.0, %v2174
        %v2191 = vsel %vm2127, 1.0, %v2175
        %v2192 = vsel %vm2128, 1.0, %v2176
        %v2193 = vsel %vm2129, 1.0, %v2177
        %v2194 = vsel %vm2130, 1.0, %v2178
        %v2195 = vadd.f32 %v2179, %v341
        %v2196 = vadd.f32 %v2180, %v342
        %v2197 = vadd.f32 %v2181, %v343
        %v2198 = vadd.f32 %v2182, %v344
        %v2199 = vadd.f32 %v2183, %v345
        %v2200 = vadd.f32 %v2184, %v346
        %v2201 = vadd.f32 %v2185, %v347
        %v2202 = vadd.f32 %v2186, %v348
        %v2203 = vadd.f32 %v2187, %v349
        %v2204 = vadd.f32 %v2188, %v350
        %v2205 = vadd.f32 %v2189, %v351
        %v2206 = vadd.f32 %v2190, %v352
        %v2207 = vadd.f32 %v2191, %v353
        %v2208 = vadd.f32 %v2192, %v354
        %v2209 = vadd.f32 %v2193, %v355
        %v2210 = vadd.f32 %v2194, %v356
        %2211 = vst [vmem:[%s340] sm:$0xff] %v2195
        %2212 = vst [vmem:[%s340 + $0x8] sm:$0xff] %v2196
        %2213 = vst [vmem:[%s340 + $0x10] sm:$0xff] %v2197
        %2214 = vst [vmem:[%s340 + $0x18] sm:$0xff] %v2198
        %2215 = vst [vmem:[%s340 + $0x20] sm:$0xff] %v2199
        %2216 = vst [vmem:[%s340 + $0x28] sm:$0xff] %v2200
        %2217 = vst [vmem:[%s340 + $0x30] sm:$0xff] %v2201
        %2218 = vst [vmem:[%s340 + $0x38] sm:$0xff] %v2202
        %2219 = vst [vmem:[%s340 + $0x40] sm:$0xff] %v2203
        %2220 = vst [vmem:[%s340 + $0x48] sm:$0xff] %v2204
        %2221 = vst [vmem:[%s340 + $0x50] sm:$0xff] %v2205
        %2222 = vst [vmem:[%s340 + $0x58] sm:$0xff] %v2206
        %2223 = vst [vmem:[%s340 + $0x60] sm:$0xff] %v2207
        %2224 = vst [vmem:[%s340 + $0x68] sm:$0xff] %v2208
        %2225 = vst [vmem:[%s340 + $0x70] sm:$0xff] %v2209
        %2226 = vst [vmem:[%s340 + $0x78] sm:$0xff] %v2210
        %s2227 = sand.u32 %s173, 1
        %s2228 = scalar_lea.sflag [#allocation6], %s2227
        %s2229 = sand.u32 %s173, 1
        %s2230 = smul.addr %s2229, 128
        %s2231 = scalar_lea.vmem [#allocation12], %s2230
        // Predicated region
        $region75: #{tpu_custom_call.1} parent=43 // pred_check
          %p2232 = pneg %p183
        $region76: #{tpu_custom_call.1} parent=43 // pred_check_branch
          %2234 = sbr.rel (%p2232) target = $region78
        $region77: #{tpu_custom_call.1} parent=43 // pred_region
          %s2236 = ssub.s32 2048, 2048
          %2237 = vsyncadd %s2228, %s2236
          %s2238 = smul.addr %s29, 16
          %s2239 = smul.addr %s2238, 128
          %s2240 = scalar_lea.hbm %s6, %s2239
          %s2241 = sshll.u32 %s2231, 4
          %s2242 = int_to_ptr.vmem [resolvable:$true] %s2241
          %2247 = dma.vmem_to_hbm [thread:$0]  %s2242, 2048, %s2240, %s2228, 128, 128, 8
        $region78: #{tpu_custom_call.1} parent=43 // pred_fallthru
          _
      $region44: #{tpu_custom_call.1} parent=5 // pred_fallthru
        _
      %p2248 = scmp.le.s32.totalorder 2, %s24
      // Predicated region
      $region79: #{tpu_custom_call.1} parent=5 // pred_check
        %p2249 = pneg %p2248
      $region80: #{tpu_custom_call.1} parent=5 // pred_check_branch
        %2251 = sbr.rel (%p2249) target = $region82
      $region81: #{tpu_custom_call.1} parent=5 // pred_region
        %s2252 = ssub.s32 %s24, 2
        // Predicated region
        $region83: #{tpu_custom_call.1} parent=81 // pred_check
          %p2253 = pneg %p189
        $region84: #{tpu_custom_call.1} parent=81 // pred_check_branch
          %2255 = sbr.rel (%p2253) target = $region86
        $region85: #{tpu_custom_call.1} parent=81 // pred_region
          %s2256 = sand.u32 %s174, 1
          %s2257 = scalar_lea.sflag [#allocation6], %s2256
          %s2258 = sand.u32 %s174, 1
          %s2259 = smul.addr %s2258, 128
          %s2260 = scalar_lea.vmem [#allocation12], %s2259
          %2261 = dma.done %s2257, 2048
        $region86: #{tpu_custom_call.1} parent=81 // pred_fallthru
          _
      $region82: #{tpu_custom_call.1} parent=5 // pred_fallthru
        _
    $region6: #{tpu_custom_call.1} parent=1 // loop_footer
      %s28 = sadd.s32 1, %s24
    $region7: #{tpu_custom_call.1} parent=1 // loop_footer_branch
      %23 = sbr.rel target = $region3
    $region8: #{tpu_custom_call.1} parent=1 // loop_exit
      _
    %2262 = vsyncpa [#allocation5], 1
    %s2263 = scalar_lea.sflag [#allocation5], 1
    %2264 = vsyncpa %s2263, 1
    %2265 = vsyncpa [#allocation8], 1
    %s2266 = scalar_lea.sflag [#allocation8], 1
    %2267 = vsyncpa %s2266, 1
    %2268 = vsyncpa [#allocation11], 1
    %2269 = vsyncpa [#allocation6], 1
    %s2270 = scalar_lea.sflag [#allocation6], 1
    %2271 = vsyncpa %s2270, 1

</llo_original>
